<compile_context>
chip_gen: v6e
topology: v6e:2x2x1
jax: 0.10.0
libtpu: 0.0.40
codegen_flags: <defaults>
</compile_context>

<pallas_src>
import jax
import jax.numpy as jnp
from jax.experimental import pallas as pl
from jax.experimental.pallas import tpu as pltpu


def gated_attn_kernel(x_ref, wab_ref, bab_ref, wc_ref, bc_ref, out_ref):
    dim = wab_ref.shape[0]

    # x tile (block_n, dim).  Expected bf16 from the producer; cast only as a
    # fallback (does not reduce the HBM stream, just keeps the MXU in bf16).
    xb = x_ref[...]
    if xb.dtype != jnp.bfloat16:
        xb = xb.astype(jnp.bfloat16)

    # Fused attention_a | attention_b Linear: one bf16 x bf16 MXU matmul with
    # f32 accumulation.  Columns [:dim] -> Tanh branch, [dim:] -> Sigmoid
    # branch (its weights/bias are pre-scaled by 0.5 at pack time).
    z = jnp.dot(xb, wab_ref[...], preferred_element_type=jnp.float32) + bab_ref[...]

    # Single EUP tanh pass (bf16) covers both branches:
    #   a       = tanh(z_a)
    #   sigmoid = 0.5 * (tanh(0.5 * z_b) + 1)   (0.5*z_b already in z)
    t = jnp.tanh(z.astype(jnp.bfloat16))              # (block_n, 2*dim) bf16
    a = t[:, :dim]                                    # lane-aligned slice
    g = (t[:, dim:] + 1.0) * 0.5                      # bf16 VPU

    # Gate + attention_c (out_dim == 1): bf16 VPU multiplies, f32 lane-sum.
    prod = (a * g * wc_ref[...]).astype(jnp.float32)  # (block_n, dim)
    s = jnp.sum(prod, axis=-1, keepdims=True)         # (block_n, 1) f32
    out_ref[...] = (s + bc_ref[0, 0]).astype(out_ref.dtype)


def prepare_params(wa, ba, wb, bb, wc, bc):
    """One-time parameter packing (do at load time, NOT per forward call).

    wa, wb : (dim, dim) pre-transposed so y = x @ W + b
    ba, bb : (1, dim);  wc : (1, dim);  bc : (1, 1)
    """
    wab = jnp.concatenate([wa, 0.5 * wb], axis=1).astype(jnp.bfloat16)  # (dim, 2*dim)
    bab = jnp.concatenate([ba, 0.5 * bb], axis=1).astype(jnp.float32)   # (1, 2*dim)
    return wab, bab, wc.astype(jnp.bfloat16), bc.astype(jnp.float32)


def attn_net_gated(x, wab, bab, wc, bc, *, block_n=2048):
    """Gated attention scores.

    x   : (N, dim), preferably bf16 straight from the producer
    wab : (dim, 2*dim) bf16 packed [Wa | 0.5*Wb]
    bab : (1, 2*dim)  f32 packed [ba | 0.5*bb]
    wc  : (1, dim) bf16 attention_c weight row (out_dim == 1)
    bc  : (1, 1) f32
    returns (N, 1) float32
    """
    N, dim = x.shape
    assert wab.shape == (dim, 2 * dim) and bab.shape == (1, 2 * dim)
    assert wc.shape == (1, dim) and bc.shape == (1, 1)
    assert block_n % 128 == 0

    # Clamp the row tile so tiny inputs are not padded to 2048 rows.
    block_n = min(block_n, max(128, pl.cdiv(N, 128) * 128))
    # If everything collapsed to one block, split into >=2 so the "parallel"
    # grid axis shards across both v7x TensorCores (cheap on 1-TC chips).
    if N > 128 and pl.cdiv(N, block_n) < 2:
        block_n = max(128, pl.cdiv(pl.cdiv(N, 2), 128) * 128)

    n_blocks = pl.cdiv(N, block_n)
    n_pad = n_blocks * block_n
    if n_pad != N:
        x = jnp.pad(x, ((0, n_pad - N), (0, 0)))

    in_specs = [
        pl.BlockSpec((block_n, dim), lambda i: (i, 0)),   # x row tile (streamed)
        pl.BlockSpec((dim, 2 * dim), lambda i: (0, 0)),   # Wa|0.5*Wb  (bf16, resident)
        pl.BlockSpec((1, 2 * dim), lambda i: (0, 0)),     # ba|0.5*bb  (f32)
        pl.BlockSpec((1, dim), lambda i: (0, 0)),         # wc row     (bf16)
        pl.BlockSpec((1, 1), lambda i: (0, 0)),           # bc
    ]
    out_spec = pl.BlockSpec((block_n, 1), lambda i: (i, 0))

    out = pl.pallas_call(
        gated_attn_kernel,
        out_shape=jax.ShapeDtypeStruct((n_pad, 1), jnp.float32),
        grid_spec=pltpu.PrefetchScalarGridSpec(
            num_scalar_prefetch=0,
            grid=(n_blocks,),
            in_specs=in_specs,
            out_specs=out_spec,
        ),
        compiler_params=pltpu.CompilerParams(
            dimension_semantics=("parallel",),
            # 2048-row tiles: ~1 MiB bf16 x tile (x2 buffers) + ~10-14 MiB of
            # f32/bf16 intermediates; above v5e's 16 MiB default scoped VMEM,
            # comfortably below v7x's 64 MiB physical VMEM.
            vmem_limit_bytes=48 * 1024 * 1024,
        ),
    )(x, wab, bab, wc, bc)

    return out[:N]


def reference(x, wa, ba, wb, bb, wc, bc):
    a = jnp.tanh(x @ wa + ba)
    b = jax.nn.sigmoid(x @ wb + bb)
    return (a * b) @ wc.T + bc


if __name__ == "__main__":
    # Module defaults: dim=256, out_dim=1.  N=1000 instances: ragged
    # (exercises the padding path) and yields a 2-block parallel grid.
    N, dim = 1000, 256

    key = jax.random.PRNGKey(0)
    kx, kwa, kba, kwb, kbb, kwc, kbc = jax.random.split(key, 7)

    scale = 1.0 / jnp.sqrt(dim)
    # The upstream producer hands bf16 activations to the kernel (halves the
    # HBM stream, which is the binding resource on v6e/v7x).
    x = jax.random.normal(kx, (N, dim), dtype=jnp.float32).astype(jnp.bfloat16)
    wa = jax.random.normal(kwa, (dim, dim), dtype=jnp.float32) * scale
    ba = jax.random.normal(kba, (1, dim), dtype=jnp.float32) * scale
    wb = jax.random.normal(kwb, (dim, dim), dtype=jnp.float32) * scale
    bb = jax.random.normal(kbb, (1, dim), dtype=jnp.float32) * scale
    wc = jax.random.normal(kwc, (1, dim), dtype=jnp.float32) * scale
    bc = jax.random.normal(kbc, (1, 1), dtype=jnp.float32) * scale

    # Pack parameters once (load-time), then run the kernel.
    wab, bab, wc_b, bc_f = prepare_params(wa, ba, wb, bb, wc, bc)
    out = attn_net_gated(x, wab, bab, wc_b, bc_f)
    out = jax.block_until_ready(out)

    # Reference on the exact (bf16-valued) inputs, f32 math + f32 weights.
    ref = reference(x.astype(jnp.float32), wa, ba, wb, bb, wc, bc)
    assert out.shape == (N, 1)
    # bf16 weights + bf16 tanh/gating chain (f32 matmul accumulation and f32
    # final reduction) -> loosened tolerance vs. the pure-f32 reference.
    max_err = float(jnp.max(jnp.abs(out - ref)))
    assert jnp.allclose(out, ref, atol=5e-2, rtol=5e-2), max_err

    print("KERNEL_OK")
</pallas_src>

<mosaic_0001>
module attributes {stable_mosaic.version = 11 : i64} {
  func.func @gated_attn_kernel(%arg0: i32, %arg1: memref<512x256xbf16, #tpu.memory_space<vmem>>, %arg2: memref<256x512xbf16, #tpu.memory_space<vmem>>, %arg3: memref<1x512xf32, #tpu.memory_space<vmem>>, %arg4: memref<1x256xbf16, #tpu.memory_space<vmem>>, %arg5: memref<1x1xf32, #tpu.memory_space<vmem>>, %arg6: memref<512x1xf32, #tpu.memory_space<vmem>>) attributes {dimension_semantics = [#tpu.dimension_semantics<parallel>], iteration_bounds = array<i64: 2>, scalar_prefetch = 0 : i64, scratch_operands = 0 : i64, tpu.core_type = #tpu.core_type<tc>, window_params = [{transform_indices = @transform_0, window_bounds = array<i64: 512, 256>}, {pipeline_mode = #tpu.pipeline_mode<synchronous>, transform_indices = @transform_1, window_bounds = array<i64: 256, 512>}, {pipeline_mode = #tpu.pipeline_mode<synchronous>, transform_indices = @transform_2, window_bounds = array<i64: 1, 512>}, {pipeline_mode = #tpu.pipeline_mode<synchronous>, transform_indices = @transform_3, window_bounds = array<i64: 1, 256>}, {pipeline_mode = #tpu.pipeline_mode<synchronous>, transform_indices = @transform_4, window_bounds = array<i64: 1, 1>}, {transform_indices = @transform_5, window_bounds = array<i64: 512, 1>}]} {
    %c0 = arith.constant 0 : index
    %c0_0 = arith.constant 0 : index
    %0 = vector.load %arg1[%c0, %c0_0] : memref<512x256xbf16, #tpu.memory_space<vmem>>, vector<512x256xbf16>
    %c0_1 = arith.constant 0 : index
    %c0_2 = arith.constant 0 : index
    %1 = vector.load %arg2[%c0_1, %c0_2] : memref<256x512xbf16, #tpu.memory_space<vmem>>, vector<256x512xbf16>
    %cst = arith.constant dense<0.000000e+00> : vector<512x512xf32>
    %2 = tpu.matmul %0, %1, %cst {dimension_numbers = #tpu.dot_dimension_numbers<[1], [0], [0], [1], [0, 0, 1, 1], [], []>} : vector<512x256xbf16>, vector<256x512xbf16>, vector<512x512xf32> -> vector<512x512xf32>
    %c0_3 = arith.constant 0 : index
    %c0_4 = arith.constant 0 : index
    %3 = vector.load %arg3[%c0_3, %c0_4] : memref<1x512xf32, #tpu.memory_space<vmem>>, vector<1x512xf32>
    %4 = vector.broadcast %3 : vector<1x512xf32> to vector<512x512xf32>
    %5 = arith.addf %2, %4 : vector<512x512xf32>
    %6 = arith.truncf %5 : vector<512x512xf32> to vector<512x512xbf16>
    %7 = math.tanh %6 : vector<512x512xbf16>
    %8 = vector.extract_strided_slice %7 {offsets = [0, 0], sizes = [512, 256], strides = [1, 1]} : vector<512x512xbf16> to vector<512x256xbf16>
    %9 = vector.extract_strided_slice %7 {offsets = [0, 256], sizes = [512, 256], strides = [1, 1]} : vector<512x512xbf16> to vector<512x256xbf16>
    %cst_5 = arith.constant 1.000000e+00 : bf16
    %10 = vector.broadcast %cst_5 : bf16 to vector<512x256xbf16>
    %11 = arith.addf %9, %10 : vector<512x256xbf16>
    %cst_6 = arith.constant 5.000000e-01 : bf16
    %12 = vector.broadcast %cst_6 : bf16 to vector<512x256xbf16>
    %13 = arith.mulf %11, %12 : vector<512x256xbf16>
    %14 = arith.mulf %8, %13 : vector<512x256xbf16>
    %c0_7 = arith.constant 0 : index
    %c0_8 = arith.constant 0 : index
    %15 = vector.load %arg4[%c0_7, %c0_8] : memref<1x256xbf16, #tpu.memory_space<vmem>>, vector<1x256xbf16>
    %16 = vector.broadcast %15 : vector<1x256xbf16> to vector<512x256xbf16>
    %17 = arith.mulf %14, %16 : vector<512x256xbf16>
    %18 = arith.extf %17 : vector<512x256xbf16> to vector<512x256xf32>
    %cst_9 = arith.constant dense<0.000000e+00> : vector<512xf32>
    %19 = vector.multi_reduction <add>, %18, %cst_9 [1] : vector<512x256xf32> to vector<512xf32>
    %20 = vector.shape_cast %19 : vector<512xf32> to vector<512x1xf32>
    %c0_10 = arith.constant 0 : index
    %c0_11 = arith.constant 0 : index
    %21 = vector.load %arg5[%c0_10, %c0_11] : memref<1x1xf32, #tpu.memory_space<vmem>>, vector<1x1xf32>
    %22 = vector.extract %21[0, 0] : f32 from vector<1x1xf32>
    %23 = vector.broadcast %22 : f32 to vector<512x1xf32>
    %24 = arith.addf %20, %23 : vector<512x1xf32>
    %c0_12 = arith.constant 0 : index
    %c0_13 = arith.constant 0 : index
    %25 = vector.load %arg6[%c0_12, %c0_13] : memref<512x1xf32, #tpu.memory_space<vmem>>, vector<512x1xf32>
    tpu.vector_store %arg6[%c0_12, %c0_13], %24 {strides = array<i32>} : memref<512x1xf32, #tpu.memory_space<vmem>>, vector<512x1xf32>,
    return
  }
  func.func @transform_0(%arg0: i32) -> (i32, i32) {
    %c0_i32 = arith.constant 0 : i32
    %c0_i32_0 = arith.constant 0 : i32
    return %arg0, %c0_i32 : i32, i32
  }
  func.func @transform_1(%arg0: i32) -> (i32, i32) {
    %c0_i32 = arith.constant 0 : i32
    %c0_i32_0 = arith.constant 0 : i32
    %c0_i32_1 = arith.constant 0 : i32
    return %c0_i32, %c0_i32_0 : i32, i32
  }
  func.func @transform_2(%arg0: i32) -> (i32, i32) {
    %c0_i32 = arith.constant 0 : i32
    %c0_i32_0 = arith.constant 0 : i32
    %c0_i32_1 = arith.constant 0 : i32
    return %c0_i32, %c0_i32_0 : i32, i32
  }
  func.func @transform_3(%arg0: i32) -> (i32, i32) {
    %c0_i32 = arith.constant 0 : i32
    %c0_i32_0 = arith.constant 0 : i32
    %c0_i32_1 = arith.constant 0 : i32
    return %c0_i32, %c0_i32_0 : i32, i32
  }
  func.func @transform_4(%arg0: i32) -> (i32, i32) {
    %c0_i32 = arith.constant 0 : i32
    %c0_i32_0 = arith.constant 0 : i32
    %c0_i32_1 = arith.constant 0 : i32
    return %c0_i32, %c0_i32_0 : i32, i32
  }
  func.func @transform_5(%arg0: i32) -> (i32, i32) {
    %c0_i32 = arith.constant 0 : i32
    %c0_i32_0 = arith.constant 0 : i32
    return %arg0, %c0_i32 : i32, i32
  }
}

</mosaic_0001>

<llo_original>
// kernel: tpu_custom_call.1
$region0: #{tpu_custom_call.1}
  #allocation0 [shape = 'u32[]', space=smem, size = 0x4, offset = 0x4, fixed_abs, tag = 'smem constant byte address 0x4 - core index']
  #allocation1 [shape = 'u32[144,128]{1,0:T(1,128)}', space=vmem, size = 0x12000, scoped, tag = 'internal scratch']
  #allocation2 [shape = 'f32[1,1]{1,0:T(1,128)S(1)}', space=vmem, size = 0x200, scoped, tag = 'scoped memory for tpu_custom_call.1']
  %s0 = inlined_call_operand.hbm [shape: bf16[1024,256], index: 0, kind: input, shape index: {}]
  %s1 = inlined_call_operand.hbm [shape: bf16[256,512], index: 1, kind: input, shape index: {}]
  %s2 = inlined_call_operand.vmem [shape: f32[1,512], index: 2, kind: input, shape index: {}]
  %s3 = inlined_call_operand.vmem [shape: bf16[1,256], index: 3, kind: input, shape index: {}]
  %s4 = inlined_call_operand.<no memory space> [shape: f32[1,1], index: 4, kind: input, shape index: {}]
  %s5 = inlined_call_operand.vmem [shape: f32[1024,1], index: 5, kind: output, shape index: {}]
  %s6 = sld [smem:[#allocation0]]
  $region61: #{tpu_custom_call.1} parent=0
    _
  %s8 = ssub.s32 1, %s6
  %s9 = scalar_select 0, %s8, %s6
  %v10 = vstv %s4
  %11 = vst [vmem:[#allocation2] sm:$0x1] %v10
  $region1: #{tpu_custom_call.1} parent=0
    #allocation3 [shape = 'u8[524288]{0}', space=vmem, size = 0x80000, scoped, tag = 'input window, operand 0']
    #allocation4 [shape = 's32[2]{0}', space=sflag, size = 0x8, scoped, tag = 'scoped memory for tpu_custom_call.1']
    #allocation5 [shape = 'u8[262144]{0}', space=vmem, size = 0x40000, scoped, tag = 'input window, operand 1, single buffered']
    #allocation6 [shape = 's32[1]{0}', space=sflag, size = 0x4, scoped, tag = 'scoped memory for tpu_custom_call.1']
    %12 = vsyncpa [#allocation4], 0
    %s13 = scalar_lea.sflag [#allocation4], 1
    %14 = vsyncpa %s13, 0
    %15 = vsyncpa [#allocation6], 0
    loop: start=0, step=1, limit=4
    $region2: #{tpu_custom_call.1} parent=1 // loop_pre_header
      _
    $region3: #{tpu_custom_call.1} parent=1 // loop_header
      %s17 = sphi 0, %s21
      %p18 = scmp.ge.s32.totalorder %s17, 4
      %s27 = sphi 0, %s29
      %s30 = sphi 0, %s27
      %s31 = sphi 0, %s30
      %s47 = sphi 0, %s31
      %s51 = sphi 0, %s51
      %s53 = sphi 0, %s51
      %s54 = sphi 0, %s53
      %s68 = sphi 0, %s54
      %s72 = sphi 0, %s72
      %s74 = sphi 0, %s72
      %s75 = sphi 0, %s74
      %s89 = sphi 0, %s75
      %s93 = sphi 0, %s93
      %s95 = sphi 0, %s93
      %s96 = sphi 0, %s95
      %s110 = sphi 0, %s96
      %s114 = sphi 0, %s114
      %s116 = sphi 0, %s114
      %s117 = sphi 0, %s116
      %s131 = sphi 0, %s117
      %s137 = sphi 0, %s139
      %s140 = sphi 0, %s137
      %s141 = sphi 0, %s140
      %s157 = sphi 0, %s141
    $region4: #{tpu_custom_call.1} parent=1 // loop_header_branch
      %20 = sbr.rel (%p18) target = $region8
    $region5: #{tpu_custom_call.1} parent=1 // loop_body
      %s22 = ssub.s32 %s17, 1
      %s23 = ssub.s32 %s17, 2
      %s24 = sadd.s32 %s17, 1
      %s25 = ssub.s32 %s17, %s24
      %p26 = scmp.eq.s32.totalorder %s25, 0
      %s28 = sadd.s32 %s27, 1
      %s29 = scalar_select %p26, %s27, %s28
      %p32 = pneg %p26
      %p33 = scmp.eq.s32.totalorder %s17, 1
      %p34 = por %p32, %p33
      %p35 = scmp.ne.s32.totalorder %s27, %s30
      %p36 = scmp.eq.s32.totalorder %s17, 0
      %p37 = por %p35, %p36
      %p38 = scmp.ne.s32.totalorder %s27, %s30
      %p39 = scmp.eq.s32.totalorder %s22, 1
      %p40 = por %p38, %p39
      %p41 = scmp.ne.s32.totalorder %s30, %s31
      %p42 = scmp.eq.s32.totalorder %s22, 0
      %p43 = por %p41, %p42
      %p44 = scmp.ne.s32.totalorder %s30, %s31
      %p45 = scmp.eq.s32.totalorder %s23, 1
      %p46 = por %p44, %p45
      %p48 = scmp.ne.s32.totalorder %s31, %s47
      %p49 = scmp.eq.s32.totalorder %s23, 0
      %p50 = por %p48, %p49
      %s52 = sadd.s32 %s51, 1
      %p55 = scmp.eq.s32.totalorder %s17, 1
      %p56 = scmp.ne.s32.totalorder %s51, %s53
      %p57 = scmp.eq.s32.totalorder %s17, 0
      %p58 = por %p56, %p57
      %p59 = scmp.ne.s32.totalorder %s51, %s53
      %p60 = scmp.eq.s32.totalorder %s22, 1
      %p61 = por %p59, %p60
      %p62 = scmp.ne.s32.totalorder %s53, %s54
      %p63 = scmp.eq.s32.totalorder %s22, 0
      %p64 = por %p62, %p63
      %p65 = scmp.ne.s32.totalorder %s53, %s54
      %p66 = scmp.eq.s32.totalorder %s23, 1
      %p67 = por %p65, %p66
      %p69 = scmp.ne.s32.totalorder %s54, %s68
      %p70 = scmp.eq.s32.totalorder %s23, 0
      %p71 = por %p69, %p70
      %s73 = sadd.s32 %s72, 1
      %p76 = scmp.eq.s32.totalorder %s17, 1
      %p77 = scmp.ne.s32.totalorder %s72, %s74
      %p78 = scmp.eq.s32.totalorder %s17, 0
      %p79 = por %p77, %p78
      %p80 = scmp.ne.s32.totalorder %s72, %s74
      %p81 = scmp.eq.s32.totalorder %s22, 1
      %p82 = por %p80, %p81
      %p83 = scmp.ne.s32.totalorder %s74, %s75
      %p84 = scmp.eq.s32.totalorder %s22, 0
      %p85 = por %p83, %p84
      %p86 = scmp.ne.s32.totalorder %s74, %s75
      %p87 = scmp.eq.s32.totalorder %s23, 1
      %p88 = por %p86, %p87
      %p90 = scmp.ne.s32.totalorder %s75, %s89
      %p91 = scmp.eq.s32.totalorder %s23, 0
      %p92 = por %p90, %p91
      %s94 = sadd.s32 %s93, 1
      %p97 = scmp.eq.s32.totalorder %s17, 1
      %p98 = scmp.ne.s32.totalorder %s93, %s95
      %p99 = scmp.eq.s32.totalorder %s17, 0
      %p100 = por %p98, %p99
      %p101 = scmp.ne.s32.totalorder %s93, %s95
      %p102 = scmp.eq.s32.totalorder %s22, 1
      %p103 = por %p101, %p102
      %p104 = scmp.ne.s32.totalorder %s95, %s96
      %p105 = scmp.eq.s32.totalorder %s22, 0
      %p106 = por %p104, %p105
      %p107 = scmp.ne.s32.totalorder %s95, %s96
      %p108 = scmp.eq.s32.totalorder %s23, 1
      %p109 = por %p107, %p108
      %p111 = scmp.ne.s32.totalorder %s96, %s110
      %p112 = scmp.eq.s32.totalorder %s23, 0
      %p113 = por %p111, %p112
      %s115 = sadd.s32 %s114, 1
      %p118 = scmp.eq.s32.totalorder %s17, 1
      %p119 = scmp.ne.s32.totalorder %s114, %s116
      %p120 = scmp.eq.s32.totalorder %s17, 0
      %p121 = por %p119, %p120
      %p122 = scmp.ne.s32.totalorder %s114, %s116
      %p123 = scmp.eq.s32.totalorder %s22, 1
      %p124 = por %p122, %p123
      %p125 = scmp.ne.s32.totalorder %s116, %s117
      %p126 = scmp.eq.s32.totalorder %s22, 0
      %p127 = por %p125, %p126
      %p128 = scmp.ne.s32.totalorder %s116, %s117
      %p129 = scmp.eq.s32.totalorder %s23, 1
      %p130 = por %p128, %p129
      %p132 = scmp.ne.s32.totalorder %s117, %s131
      %p133 = scmp.eq.s32.totalorder %s23, 0
      %p134 = por %p132, %p133
      %s135 = ssub.s32 %s17, %s24
      %p136 = scmp.eq.s32.totalorder %s135, 0
      %s138 = sadd.s32 %s137, 1
      %s139 = scalar_select %p136, %s137, %s138
      %p142 = pneg %p136
      %p143 = scmp.eq.s32.totalorder %s17, 1
      %p144 = por %p142, %p143
      %p145 = scmp.ne.s32.totalorder %s137, %s140
      %p146 = scmp.eq.s32.totalorder %s17, 0
      %p147 = por %p145, %p146
      %p148 = scmp.ne.s32.totalorder %s137, %s140
      %p149 = scmp.eq.s32.totalorder %s22, 1
      %p150 = por %p148, %p149
      %p151 = scmp.ne.s32.totalorder %s140, %s141
      %p152 = scmp.eq.s32.totalorder %s22, 0
      %p153 = por %p151, %p152
      %p154 = scmp.ne.s32.totalorder %s140, %s141
      %p155 = scmp.eq.s32.totalorder %s23, 1
      %p156 = por %p154, %p155
      %p158 = scmp.ne.s32.totalorder %s141, %s157
      %p159 = scmp.eq.s32.totalorder %s23, 0
      %p160 = por %p158, %p159
      %p161 = scmp.le.s32.totalorder 1, %s17
      %p162 = scmp.lt.s32.totalorder %s17, 3
      %p163 = pnand %p161, %p162
      %p164 = pneg %p163
      // Predicated region
      $region9: #{tpu_custom_call.1} parent=5 // pred_check
        _
      $region10: #{tpu_custom_call.1} parent=5 // pred_check_branch
        %166 = sbr.rel (%p163) target = $region12
      $region11: #{tpu_custom_call.1} parent=5 // pred_region
        %s167 = ssub.s32 %s17, 1
        // Predicated region
        $region13: #{tpu_custom_call.1} parent=11 // pred_check
          %p168 = pneg %p64
        $region14: #{tpu_custom_call.1} parent=11 // pred_check_branch
          %170 = sbr.rel (%p168) target = $region16
        $region15: #{tpu_custom_call.1} parent=11 // pred_region
          %s172 = ssub.s32 8192, 8192
          %173 = vsyncadd [#allocation6], %s172
          %s174 = sshll.u32 [#allocation5], 4
          %s175 = int_to_ptr.vmem [resolvable:$true] %s174
          %180 = dma.hbm_to_vmem [thread:$0]  %s1, 8192, %s175, [#allocation6], 256, 256, 16
        $region16: #{tpu_custom_call.1} parent=11 // pred_fallthru
          _
        // Predicated region
        $region17: #{tpu_custom_call.1} parent=11 // pred_check
          %p181 = pneg %p85
        $region18: #{tpu_custom_call.1} parent=11 // pred_check_branch
          %183 = sbr.rel (%p181) target = $region20
        $region19: #{tpu_custom_call.1} parent=11 // pred_region
          _
        $region20: #{tpu_custom_call.1} parent=11 // pred_fallthru
          _
        // Predicated region
        $region21: #{tpu_custom_call.1} parent=11 // pred_check
          %p184 = pneg %p106
        $region22: #{tpu_custom_call.1} parent=11 // pred_check_branch
          %186 = sbr.rel (%p184) target = $region24
        $region23: #{tpu_custom_call.1} parent=11 // pred_region
          _
        $region24: #{tpu_custom_call.1} parent=11 // pred_fallthru
          _
        // Predicated region
        $region25: #{tpu_custom_call.1} parent=11 // pred_check
          %p187 = pneg %p127
        $region26: #{tpu_custom_call.1} parent=11 // pred_check_branch
          %189 = sbr.rel (%p187) target = $region28
        $region27: #{tpu_custom_call.1} parent=11 // pred_region
          _
        $region28: #{tpu_custom_call.1} parent=11 // pred_fallthru
          _
      $region12: #{tpu_custom_call.1} parent=5 // pred_fallthru
        _
      %p190 = scmp.lt.s32.totalorder %s17, 2
      // Predicated region
      $region29: #{tpu_custom_call.1} parent=5 // pred_check
        %p191 = pneg %p190
      $region30: #{tpu_custom_call.1} parent=5 // pred_check_branch
        %193 = sbr.rel (%p191) target = $region32
      $region31: #{tpu_custom_call.1} parent=5 // pred_region
        // Predicated region
        $region33: #{tpu_custom_call.1} parent=31 // pred_check
          %p194 = pneg %p37
        $region34: #{tpu_custom_call.1} parent=31 // pred_check_branch
          %196 = sbr.rel (%p194) target = $region36
        $region35: #{tpu_custom_call.1} parent=31 // pred_region
          %s197 = sand.u32 %s27, 1
          %s198 = scalar_lea.sflag [#allocation4], %s197
          %s199 = sand.u32 %s27, 1
          %s200 = smul.addr %s199, 512
          %s201 = scalar_lea.vmem [#allocation3], %s200
          %s202 = smul.u32 64, %s17
          %s204 = ssub.s32 8192, 8192
          %205 = vsyncadd %s198, %s204
          %s206 = smul.addr %s202, 2
          %s207 = smul.addr %s206, 64
          %s208 = scalar_lea.hbm %s0, %s207
          %s209 = sshll.u32 %s201, 4
          %s210 = int_to_ptr.vmem [resolvable:$true] %s209
          %215 = dma.hbm_to_vmem [thread:$0]  %s208, 8192, %s210, %s198, 128, 128, 8
        $region36: #{tpu_custom_call.1} parent=31 // pred_fallthru
          _
      $region32: #{tpu_custom_call.1} parent=5 // pred_fallthru
        _
      %p216 = scmp.le.s32.totalorder 1, %s17
      %p217 = scmp.lt.s32.totalorder %s17, 3
      %p218 = pnand %p216, %p217
      %p219 = pneg %p218
      // Predicated region
      $region37: #{tpu_custom_call.1} parent=5 // pred_check
        _
      $region38: #{tpu_custom_call.1} parent=5 // pred_check_branch
        %221 = sbr.rel (%p218) target = $region40
      $region39: #{tpu_custom_call.1} parent=5 // pred_region
        %s222 = ssub.s32 %s17, 1
        %s223 = sand.u32 %s30, 1
        %s224 = scalar_lea.sflag [#allocation4], %s223
        %s225 = sand.u32 %s30, 1
        %s226 = smul.addr %s225, 512
        %s227 = scalar_lea.vmem [#allocation3], %s226
        // Predicated region
        $region41: #{tpu_custom_call.1} parent=39 // pred_check
          %p228 = pneg %p43
        $region42: #{tpu_custom_call.1} parent=39 // pred_check_branch
          %230 = sbr.rel (%p228) target = $region44
        $region43: #{tpu_custom_call.1} parent=39 // pred_region
          %231 = dma.done %s224, 8192
        $region44: #{tpu_custom_call.1} parent=39 // pred_fallthru
          _
        // Predicated region
        $region45: #{tpu_custom_call.1} parent=39 // pred_check
          %p232 = pneg %p64
        $region46: #{tpu_custom_call.1} parent=39 // pred_check_branch
          %234 = sbr.rel (%p232) target = $region48
        $region47: #{tpu_custom_call.1} parent=39 // pred_region
          %235 = dma.done [#allocation6], 8192
        $region48: #{tpu_custom_call.1} parent=39 // pred_fallthru
          _
        %s236 = sand.u32 %s30, 1
        %s237 = scalar_lea.sflag [#allocation4], %s236
        %s238 = sand.u32 %s30, 1
        %s239 = smul.addr %s238, 512
        %s240 = scalar_lea.vmem [#allocation3], %s239
        %p241 = pneg %p43
        %p242 = pneg %p40
        %p243 = pneg %p64
        %p244 = pneg %p61
        %p245 = pneg %p85
        %p246 = pneg %p82
        %p247 = pneg %p106
        %p248 = pneg %p103
        %p249 = pneg %p127
        %p250 = pneg %p124
        %p251 = pneg %p153
        %p252 = pneg %p150
        %s253 = smul.u32 64, %s22
        %p254 = scmp.lt.s32.totalorder %s253, 127
        %s255 = scalar_select %p254, %s253, 127
        %s256 = smul.addr %s255, 8
        %s257 = scalar_lea.vmem %s5, %s256
        %s258 = smul.u32 64, %s22
        %s259 = smul.u32 64, %s22
        %p260 = scmp.lt.s32.totalorder %s259, 127
        %s261 = scalar_select %p260, %s259, 127
        %s262 = smul.addr %s261, 8
        %s263 = scalar_lea.vmem %s5, %s262
        %s264 = smul.u32 64, %s22
        %v267 = vld [vmem:[%s227] sm:$0xff]
        %v268 = vld [vmem:[%s227 + $0x8] sm:$0xff]
        %v269 = vld [vmem:[%s227 + $0x10] sm:$0xff]
        %v270 = vld [vmem:[%s227 + $0x18] sm:$0xff]
        %v271 = vld [vmem:[%s227 + $0x20] sm:$0xff]
        %v272 = vld [vmem:[%s227 + $0x28] sm:$0xff]
        %v273 = vld [vmem:[%s227 + $0x30] sm:$0xff]
        %v274 = vld [vmem:[%s227 + $0x38] sm:$0xff]
        %v275 = vld [vmem:[%s227 + $0x40] sm:$0xff]
        %v276 = vld [vmem:[%s227 + $0x48] sm:$0xff]
        %v277 = vld [vmem:[%s227 + $0x50] sm:$0xff]
        %v278 = vld [vmem:[%s227 + $0x58] sm:$0xff]
        %v279 = vld [vmem:[%s227 + $0x60] sm:$0xff]
        %v280 = vld [vmem:[%s227 + $0x68] sm:$0xff]
        %v281 = vld [vmem:[%s227 + $0x70] sm:$0xff]
        %v282 = vld [vmem:[%s227 + $0x78] sm:$0xff]
        %v283 = vld [vmem:[%s227 + $0x80] sm:$0xff]
        %v284 = vld [vmem:[%s227 + $0x88] sm:$0xff]
        %v285 = vld [vmem:[%s227 + $0x90] sm:$0xff]
        %v286 = vld [vmem:[%s227 + $0x98] sm:$0xff]
        %v287 = vld [vmem:[%s227 + $0xa0] sm:$0xff]
        %v288 = vld [vmem:[%s227 + $0xa8] sm:$0xff]
        %v289 = vld [vmem:[%s227 + $0xb0] sm:$0xff]
        %v290 = vld [vmem:[%s227 + $0xb8] sm:$0xff]
        %v291 = vld [vmem:[%s227 + $0xc0] sm:$0xff]
        %v292 = vld [vmem:[%s227 + $0xc8] sm:$0xff]
        %v293 = vld [vmem:[%s227 + $0xd0] sm:$0xff]
        %v294 = vld [vmem:[%s227 + $0xd8] sm:$0xff]
        %v295 = vld [vmem:[%s227 + $0xe0] sm:$0xff]
        %v296 = vld [vmem:[%s227 + $0xe8] sm:$0xff]
        %v297 = vld [vmem:[%s227 + $0xf0] sm:$0xff]
        %v298 = vld [vmem:[%s227 + $0xf8] sm:$0xff]
        %v299 = vld [vmem:[%s227 + $0x100] sm:$0xff]
        %v300 = vld [vmem:[%s227 + $0x108] sm:$0xff]
        %v301 = vld [vmem:[%s227 + $0x110] sm:$0xff]
        %v302 = vld [vmem:[%s227 + $0x118] sm:$0xff]
        %v303 = vld [vmem:[%s227 + $0x120] sm:$0xff]
        %v304 = vld [vmem:[%s227 + $0x128] sm:$0xff]
        %v305 = vld [vmem:[%s227 + $0x130] sm:$0xff]
        %v306 = vld [vmem:[%s227 + $0x138] sm:$0xff]
        %v307 = vld [vmem:[%s227 + $0x140] sm:$0xff]
        %v308 = vld [vmem:[%s227 + $0x148] sm:$0xff]
        %v309 = vld [vmem:[%s227 + $0x150] sm:$0xff]
        %v310 = vld [vmem:[%s227 + $0x158] sm:$0xff]
        %v311 = vld [vmem:[%s227 + $0x160] sm:$0xff]
        %v312 = vld [vmem:[%s227 + $0x168] sm:$0xff]
        %v313 = vld [vmem:[%s227 + $0x170] sm:$0xff]
        %v314 = vld [vmem:[%s227 + $0x178] sm:$0xff]
        %v315 = vld [vmem:[%s227 + $0x180] sm:$0xff]
        %v316 = vld [vmem:[%s227 + $0x188] sm:$0xff]
        %v317 = vld [vmem:[%s227 + $0x190] sm:$0xff]
        %v318 = vld [vmem:[%s227 + $0x198] sm:$0xff]
        %v319 = vld [vmem:[%s227 + $0x1a0] sm:$0xff]
        %v320 = vld [vmem:[%s227 + $0x1a8] sm:$0xff]
        %v321 = vld [vmem:[%s227 + $0x1b0] sm:$0xff]
        %v322 = vld [vmem:[%s227 + $0x1b8] sm:$0xff]
        %v323 = vld [vmem:[%s227 + $0x1c0] sm:$0xff]
        %v324 = vld [vmem:[%s227 + $0x1c8] sm:$0xff]
        %v325 = vld [vmem:[%s227 + $0x1d0] sm:$0xff]
        %v326 = vld [vmem:[%s227 + $0x1d8] sm:$0xff]
        %v327 = vld [vmem:[%s227 + $0x1e0] sm:$0xff]
        %v328 = vld [vmem:[%s227 + $0x1e8] sm:$0xff]
        %v329 = vld [vmem:[%s227 + $0x1f0] sm:$0xff]
        %v330 = vld [vmem:[%s227 + $0x1f8] sm:$0xff]
        %v331 = vld [vmem:[#allocation5] sm:$0xff]
        %v332 = vld [vmem:[#allocation5 + $0x8] sm:$0xff]
        %v333 = vld [vmem:[#allocation5 + $0x10] sm:$0xff]
        %v334 = vld [vmem:[#allocation5 + $0x18] sm:$0xff]
        %v335 = vld [vmem:[#allocation5 + $0x20] sm:$0xff]
        %v336 = vld [vmem:[#allocation5 + $0x28] sm:$0xff]
        %v337 = vld [vmem:[#allocation5 + $0x30] sm:$0xff]
        %v338 = vld [vmem:[#allocation5 + $0x38] sm:$0xff]
        %v339 = vld [vmem:[#allocation5 + $0x40] sm:$0xff]
        %v340 = vld [vmem:[#allocation5 + $0x48] sm:$0xff]
        %v341 = vld [vmem:[#allocation5 + $0x50] sm:$0xff]
        %v342 = vld [vmem:[#allocation5 + $0x58] sm:$0xff]
        %v343 = vld [vmem:[#allocation5 + $0x60] sm:$0xff]
        %v344 = vld [vmem:[#allocation5 + $0x68] sm:$0xff]
        %v345 = vld [vmem:[#allocation5 + $0x70] sm:$0xff]
        %v346 = vld [vmem:[#allocation5 + $0x78] sm:$0xff]
        %v347 = vld [vmem:[#allocation5 + $0x80] sm:$0xff]
        %v348 = vld [vmem:[#allocation5 + $0x88] sm:$0xff]
        %v349 = vld [vmem:[#allocation5 + $0x90] sm:$0xff]
        %v350 = vld [vmem:[#allocation5 + $0x98] sm:$0xff]
        %v351 = vld [vmem:[#allocation5 + $0xa0] sm:$0xff]
        %v352 = vld [vmem:[#allocation5 + $0xa8] sm:$0xff]
        %v353 = vld [vmem:[#allocation5 + $0xb0] sm:$0xff]
        %v354 = vld [vmem:[#allocation5 + $0xb8] sm:$0xff]
        %v355 = vld [vmem:[#allocation5 + $0xc0] sm:$0xff]
        %v356 = vld [vmem:[#allocation5 + $0xc8] sm:$0xff]
        %v357 = vld [vmem:[#allocation5 + $0xd0] sm:$0xff]
        %v358 = vld [vmem:[#allocation5 + $0xd8] sm:$0xff]
        %v359 = vld [vmem:[#allocation5 + $0xe0] sm:$0xff]
        %v360 = vld [vmem:[#allocation5 + $0xe8] sm:$0xff]
        %v361 = vld [vmem:[#allocation5 + $0xf0] sm:$0xff]
        %v362 = vld [vmem:[#allocation5 + $0xf8] sm:$0xff]
        %v363 = vld [vmem:[#allocation5 + $0x100] sm:$0xff]
        %v364 = vld [vmem:[#allocation5 + $0x108] sm:$0xff]
        %v365 = vld [vmem:[#allocation5 + $0x110] sm:$0xff]
        %v366 = vld [vmem:[#allocation5 + $0x118] sm:$0xff]
        %v367 = vld [vmem:[#allocation5 + $0x120] sm:$0xff]
        %v368 = vld [vmem:[#allocation5 + $0x128] sm:$0xff]
        %v369 = vld [vmem:[#allocation5 + $0x130] sm:$0xff]
        %v370 = vld [vmem:[#allocation5 + $0x138] sm:$0xff]
        %v371 = vld [vmem:[#allocation5 + $0x140] sm:$0xff]
        %v372 = vld [vmem:[#allocation5 + $0x148] sm:$0xff]
        %v373 = vld [vmem:[#allocation5 + $0x150] sm:$0xff]
        %v374 = vld [vmem:[#allocation5 + $0x158] sm:$0xff]
        %v375 = vld [vmem:[#allocation5 + $0x160] sm:$0xff]
        %v376 = vld [vmem:[#allocation5 + $0x168] sm:$0xff]
        %v377 = vld [vmem:[#allocation5 + $0x170] sm:$0xff]
        %v378 = vld [vmem:[#allocation5 + $0x178] sm:$0xff]
        %v379 = vld [vmem:[#allocation5 + $0x180] sm:$0xff]
        %v380 = vld [vmem:[#allocation5 + $0x188] sm:$0xff]
        %v381 = vld [vmem:[#allocation5 + $0x190] sm:$0xff]
        %v382 = vld [vmem:[#allocation5 + $0x198] sm:$0xff]
        %v383 = vld [vmem:[#allocation5 + $0x1a0] sm:$0xff]
        %v384 = vld [vmem:[#allocation5 + $0x1a8] sm:$0xff]
        %v385 = vld [vmem:[#allocation5 + $0x1b0] sm:$0xff]
        %v386 = vld [vmem:[#allocation5 + $0x1b8] sm:$0xff]
        %v387 = vld [vmem:[#allocation5 + $0x1c0] sm:$0xff]
        %v388 = vld [vmem:[#allocation5 + $0x1c8] sm:$0xff]
        %v389 = vld [vmem:[#allocation5 + $0x1d0] sm:$0xff]
        %v390 = vld [vmem:[#allocation5 + $0x1d8] sm:$0xff]
        %v391 = vld [vmem:[#allocation5 + $0x1e0] sm:$0xff]
        %v392 = vld [vmem:[#allocation5 + $0x1e8] sm:$0xff]
        %v393 = vld [vmem:[#allocation5 + $0x1f0] sm:$0xff]
        %v394 = vld [vmem:[#allocation5 + $0x1f8] sm:$0xff]
        %v395 = vld [vmem:[%s2] sm:$0xf]
        %v397 = vlaneseq
        %v398 = vshrl.u32 %v397, 7
        %v399 = vsub.s32 0, %v398
        %v400 = vrot.slane %v395, %v399
        %v401 = vlaneseq
        %v402 = vshrl.u32 %v401, 7
        %v403 = vsub.s32 1, %v402
        %v404 = vrot.slane %v395, %v403
        %v405 = vlaneseq
        %v406 = vshrl.u32 %v405, 7
        %v407 = vsub.s32 2, %v406
        %v408 = vrot.slane %v395, %v407
        %v409 = vlaneseq
        %v410 = vshrl.u32 %v409, 7
        %v411 = vsub.s32 3, %v410
        %v412 = vrot.slane %v395, %v411
        %v481 = vunpack.c.l.b16 %v267
        %v482 = vunpack.c.h.b16 %v267
        %v483 = vunpack.c.l.b16 %v268
        %v484 = vunpack.c.h.b16 %v268
        %v485 = vunpack.c.l.b16 %v269
        %v486 = vunpack.c.h.b16 %v269
        %v487 = vunpack.c.l.b16 %v270
        %v488 = vunpack.c.h.b16 %v270
        %v489 = vunpack.c.l.b16 %v271
        %v490 = vunpack.c.h.b16 %v271
        %v491 = vunpack.c.l.b16 %v272
        %v492 = vunpack.c.h.b16 %v272
        %v493 = vunpack.c.l.b16 %v273
        %v494 = vunpack.c.h.b16 %v273
        %v495 = vunpack.c.l.b16 %v274
        %v496 = vunpack.c.h.b16 %v274
        %v497 = vunpack.c.l.b16 %v275
        %v498 = vunpack.c.h.b16 %v275
        %v499 = vunpack.c.l.b16 %v276
        %v500 = vunpack.c.h.b16 %v276
        %v501 = vunpack.c.l.b16 %v277
        %v502 = vunpack.c.h.b16 %v277
        %v503 = vunpack.c.l.b16 %v278
        %v504 = vunpack.c.h.b16 %v278
        %v505 = vunpack.c.l.b16 %v279
        %v506 = vunpack.c.h.b16 %v279
        %v507 = vunpack.c.l.b16 %v280
        %v508 = vunpack.c.h.b16 %v280
        %v509 = vunpack.c.l.b16 %v281
        %v510 = vunpack.c.h.b16 %v281
        %v511 = vunpack.c.l.b16 %v282
        %v512 = vunpack.c.h.b16 %v282
        %v513 = vunpack.c.l.b16 %v283
        %v514 = vunpack.c.h.b16 %v283
        %v515 = vunpack.c.l.b16 %v284
        %v516 = vunpack.c.h.b16 %v284
        %v517 = vunpack.c.l.b16 %v285
        %v518 = vunpack.c.h.b16 %v285
        %v519 = vunpack.c.l.b16 %v286
        %v520 = vunpack.c.h.b16 %v286
        %v521 = vunpack.c.l.b16 %v287
        %v522 = vunpack.c.h.b16 %v287
        %v523 = vunpack.c.l.b16 %v288
        %v524 = vunpack.c.h.b16 %v288
        %v525 = vunpack.c.l.b16 %v289
        %v526 = vunpack.c.h.b16 %v289
        %v527 = vunpack.c.l.b16 %v290
        %v528 = vunpack.c.h.b16 %v290
        %v529 = vunpack.c.l.b16 %v291
        %v530 = vunpack.c.h.b16 %v291
        %v531 = vunpack.c.l.b16 %v292
        %v532 = vunpack.c.h.b16 %v292
        %v533 = vunpack.c.l.b16 %v293
        %v534 = vunpack.c.h.b16 %v293
        %v535 = vunpack.c.l.b16 %v294
        %v536 = vunpack.c.h.b16 %v294
        %v537 = vunpack.c.l.b16 %v295
        %v538 = vunpack.c.h.b16 %v295
        %v539 = vunpack.c.l.b16 %v296
        %v540 = vunpack.c.h.b16 %v296
        %v541 = vunpack.c.l.b16 %v297
        %v542 = vunpack.c.h.b16 %v297
        %v543 = vunpack.c.l.b16 %v298
        %v544 = vunpack.c.h.b16 %v298
        %v545 = vunpack.c.l.b16 %v299
        %v546 = vunpack.c.h.b16 %v299
        %v547 = vunpack.c.l.b16 %v300
        %v548 = vunpack.c.h.b16 %v300
        %v549 = vunpack.c.l.b16 %v301
        %v550 = vunpack.c.h.b16 %v301
        %v551 = vunpack.c.l.b16 %v302
        %v552 = vunpack.c.h.b16 %v302
        %v553 = vunpack.c.l.b16 %v303
        %v554 = vunpack.c.h.b16 %v303
        %v555 = vunpack.c.l.b16 %v304
        %v556 = vunpack.c.h.b16 %v304
        %v557 = vunpack.c.l.b16 %v305
        %v558 = vunpack.c.h.b16 %v305
        %v559 = vunpack.c.l.b16 %v306
        %v560 = vunpack.c.h.b16 %v306
        %v561 = vunpack.c.l.b16 %v307
        %v562 = vunpack.c.h.b16 %v307
        %v563 = vunpack.c.l.b16 %v308
        %v564 = vunpack.c.h.b16 %v308
        %v565 = vunpack.c.l.b16 %v309
        %v566 = vunpack.c.h.b16 %v309
        %v567 = vunpack.c.l.b16 %v310
        %v568 = vunpack.c.h.b16 %v310
        %v569 = vunpack.c.l.b16 %v311
        %v570 = vunpack.c.h.b16 %v311
        %v571 = vunpack.c.l.b16 %v312
        %v572 = vunpack.c.h.b16 %v312
        %v573 = vunpack.c.l.b16 %v313
        %v574 = vunpack.c.h.b16 %v313
        %v575 = vunpack.c.l.b16 %v314
        %v576 = vunpack.c.h.b16 %v314
        %v577 = vunpack.c.l.b16 %v315
        %v578 = vunpack.c.h.b16 %v315
        %v579 = vunpack.c.l.b16 %v316
        %v580 = vunpack.c.h.b16 %v316
        %v581 = vunpack.c.l.b16 %v317
        %v582 = vunpack.c.h.b16 %v317
        %v583 = vunpack.c.l.b16 %v318
        %v584 = vunpack.c.h.b16 %v318
        %v585 = vunpack.c.l.b16 %v319
        %v586 = vunpack.c.h.b16 %v319
        %v587 = vunpack.c.l.b16 %v320
        %v588 = vunpack.c.h.b16 %v320
        %v589 = vunpack.c.l.b16 %v321
        %v590 = vunpack.c.h.b16 %v321
        %v591 = vunpack.c.l.b16 %v322
        %v592 = vunpack.c.h.b16 %v322
        %v593 = vunpack.c.l.b16 %v323
        %v594 = vunpack.c.h.b16 %v323
        %v595 = vunpack.c.l.b16 %v324
        %v596 = vunpack.c.h.b16 %v324
        %v597 = vunpack.c.l.b16 %v325
        %v598 = vunpack.c.h.b16 %v325
        %v599 = vunpack.c.l.b16 %v326
        %v600 = vunpack.c.h.b16 %v326
        %v601 = vunpack.c.l.b16 %v327
        %v602 = vunpack.c.h.b16 %v327
        %v603 = vunpack.c.l.b16 %v328
        %v604 = vunpack.c.h.b16 %v328
        %v605 = vunpack.c.l.b16 %v329
        %v606 = vunpack.c.h.b16 %v329
        %v607 = vunpack.c.l.b16 %v330
        %v608 = vunpack.c.h.b16 %v330
        %v609 = vpack.c.b16 %v483, %v481
        %v610 = vpack.c.b16 %v484, %v482
        %v611 = vpack.c.b16 %v487, %v485
        %v612 = vpack.c.b16 %v488, %v486
        %v613 = vpack.c.b16 %v491, %v489
        %v614 = vpack.c.b16 %v492, %v490
        %v615 = vpack.c.b16 %v495, %v493
        %v616 = vpack.c.b16 %v496, %v494
        %v617 = vpack.c.b16 %v499, %v497
        %v618 = vpack.c.b16 %v500, %v498
        %v619 = vpack.c.b16 %v503, %v501
        %v620 = vpack.c.b16 %v504, %v502
        %v621 = vpack.c.b16 %v507, %v505
        %v622 = vpack.c.b16 %v508, %v506
        %v623 = vpack.c.b16 %v511, %v509
        %v624 = vpack.c.b16 %v512, %v510
        %v625 = vpack.c.b16 %v515, %v513
        %v626 = vpack.c.b16 %v516, %v514
        %v627 = vpack.c.b16 %v519, %v517
        %v628 = vpack.c.b16 %v520, %v518
        %v629 = vpack.c.b16 %v523, %v521
        %v630 = vpack.c.b16 %v524, %v522
        %v631 = vpack.c.b16 %v527, %v525
        %v632 = vpack.c.b16 %v528, %v526
        %v633 = vpack.c.b16 %v531, %v529
        %v634 = vpack.c.b16 %v532, %v530
        %v635 = vpack.c.b16 %v535, %v533
        %v636 = vpack.c.b16 %v536, %v534
        %v637 = vpack.c.b16 %v539, %v537
        %v638 = vpack.c.b16 %v540, %v538
        %v639 = vpack.c.b16 %v543, %v541
        %v640 = vpack.c.b16 %v544, %v542
        %v641 = vpack.c.b16 %v547, %v545
        %v642 = vpack.c.b16 %v548, %v546
        %v643 = vpack.c.b16 %v551, %v549
        %v644 = vpack.c.b16 %v552, %v550
        %v645 = vpack.c.b16 %v555, %v553
        %v646 = vpack.c.b16 %v556, %v554
        %v647 = vpack.c.b16 %v559, %v557
        %v648 = vpack.c.b16 %v560, %v558
        %v649 = vpack.c.b16 %v563, %v561
        %v650 = vpack.c.b16 %v564, %v562
        %v651 = vpack.c.b16 %v567, %v565
        %v652 = vpack.c.b16 %v568, %v566
        %v653 = vpack.c.b16 %v571, %v569
        %v654 = vpack.c.b16 %v572, %v570
        %v655 = vpack.c.b16 %v575, %v573
        %v656 = vpack.c.b16 %v576, %v574
        %v657 = vpack.c.b16 %v579, %v577
        %v658 = vpack.c.b16 %v580, %v578
        %v659 = vpack.c.b16 %v583, %v581
        %v660 = vpack.c.b16 %v584, %v582
        %v661 = vpack.c.b16 %v587, %v585
        %v662 = vpack.c.b16 %v588, %v586
        %v663 = vpack.c.b16 %v591, %v589
        %v664 = vpack.c.b16 %v592, %v590
        %v665 = vpack.c.b16 %v595, %v593
        %v666 = vpack.c.b16 %v596, %v594
        %v667 = vpack.c.b16 %v599, %v597
        %v668 = vpack.c.b16 %v600, %v598
        %v669 = vpack.c.b16 %v603, %v601
        %v670 = vpack.c.b16 %v604, %v602
        %v671 = vpack.c.b16 %v607, %v605
        %v672 = vpack.c.b16 %v608, %v606
        %v801 = vunpack.c.l.b16 %v331
        %v802 = vunpack.c.h.b16 %v331
        %v803 = vunpack.c.l.b16 %v332
        %v804 = vunpack.c.h.b16 %v332
        %v805 = vunpack.c.l.b16 %v333
        %v806 = vunpack.c.h.b16 %v333
        %v807 = vunpack.c.l.b16 %v334
        %v808 = vunpack.c.h.b16 %v334
        %v809 = vunpack.c.l.b16 %v335
        %v810 = vunpack.c.h.b16 %v335
        %v811 = vunpack.c.l.b16 %v336
        %v812 = vunpack.c.h.b16 %v336
        %v813 = vunpack.c.l.b16 %v337
        %v814 = vunpack.c.h.b16 %v337
        %v815 = vunpack.c.l.b16 %v338
        %v816 = vunpack.c.h.b16 %v338
        %v817 = vunpack.c.l.b16 %v339
        %v818 = vunpack.c.h.b16 %v339
        %v819 = vunpack.c.l.b16 %v340
        %v820 = vunpack.c.h.b16 %v340
        %v821 = vunpack.c.l.b16 %v341
        %v822 = vunpack.c.h.b16 %v341
        %v823 = vunpack.c.l.b16 %v342
        %v824 = vunpack.c.h.b16 %v342
        %v825 = vunpack.c.l.b16 %v343
        %v826 = vunpack.c.h.b16 %v343
        %v827 = vunpack.c.l.b16 %v344
        %v828 = vunpack.c.h.b16 %v344
        %v829 = vunpack.c.l.b16 %v345
        %v830 = vunpack.c.h.b16 %v345
        %v831 = vunpack.c.l.b16 %v346
        %v832 = vunpack.c.h.b16 %v346
        %v833 = vunpack.c.l.b16 %v347
        %v834 = vunpack.c.h.b16 %v347
        %v835 = vunpack.c.l.b16 %v348
        %v836 = vunpack.c.h.b16 %v348
        %v837 = vunpack.c.l.b16 %v349
        %v838 = vunpack.c.h.b16 %v349
        %v839 = vunpack.c.l.b16 %v350
        %v840 = vunpack.c.h.b16 %v350
        %v841 = vunpack.c.l.b16 %v351
        %v842 = vunpack.c.h.b16 %v351
        %v843 = vunpack.c.l.b16 %v352
        %v844 = vunpack.c.h.b16 %v352
        %v845 = vunpack.c.l.b16 %v353
        %v846 = vunpack.c.h.b16 %v353
        %v847 = vunpack.c.l.b16 %v354
        %v848 = vunpack.c.h.b16 %v354
        %v849 = vunpack.c.l.b16 %v355
        %v850 = vunpack.c.h.b16 %v355
        %v851 = vunpack.c.l.b16 %v356
        %v852 = vunpack.c.h.b16 %v356
        %v853 = vunpack.c.l.b16 %v357
        %v854 = vunpack.c.h.b16 %v357
        %v855 = vunpack.c.l.b16 %v358
        %v856 = vunpack.c.h.b16 %v358
        %v857 = vunpack.c.l.b16 %v359
        %v858 = vunpack.c.h.b16 %v359
        %v859 = vunpack.c.l.b16 %v360
        %v860 = vunpack.c.h.b16 %v360
        %v861 = vunpack.c.l.b16 %v361
        %v862 = vunpack.c.h.b16 %v361
        %v863 = vunpack.c.l.b16 %v362
        %v864 = vunpack.c.h.b16 %v362
        %v865 = vunpack.c.l.b16 %v363
        %v866 = vunpack.c.h.b16 %v363
        %v867 = vunpack.c.l.b16 %v364
        %v868 = vunpack.c.h.b16 %v364
        %v869 = vunpack.c.l.b16 %v365
        %v870 = vunpack.c.h.b16 %v365
        %v871 = vunpack.c.l.b16 %v366
        %v872 = vunpack.c.h.b16 %v366
        %v873 = vunpack.c.l.b16 %v367
        %v874 = vunpack.c.h.b16 %v367
        %v875 = vunpack.c.l.b16 %v368
        %v876 = vunpack.c.h.b16 %v368
        %v877 = vunpack.c.l.b16 %v369
        %v878 = vunpack.c.h.b16 %v369
        %v879 = vunpack.c.l.b16 %v370
        %v880 = vunpack.c.h.b16 %v370
        %v881 = vunpack.c.l.b16 %v371
        %v882 = vunpack.c.h.b16 %v371
        %v883 = vunpack.c.l.b16 %v372
        %v884 = vunpack.c.h.b16 %v372
        %v885 = vunpack.c.l.b16 %v373
        %v886 = vunpack.c.h.b16 %v373
        %v887 = vunpack.c.l.b16 %v374
        %v888 = vunpack.c.h.b16 %v374
        %v889 = vunpack.c.l.b16 %v375
        %v890 = vunpack.c.h.b16 %v375
        %v891 = vunpack.c.l.b16 %v376
        %v892 = vunpack.c.h.b16 %v376
        %v893 = vunpack.c.l.b16 %v377
        %v894 = vunpack.c.h.b16 %v377
        %v895 = vunpack.c.l.b16 %v378
        %v896 = vunpack.c.h.b16 %v378
        %v897 = vunpack.c.l.b16 %v379
        %v898 = vunpack.c.h.b16 %v379
        %v899 = vunpack.c.l.b16 %v380
        %v900 = vunpack.c.h.b16 %v380
        %v901 = vunpack.c.l.b16 %v381
        %v902 = vunpack.c.h.b16 %v381
        %v903 = vunpack.c.l.b16 %v382
        %v904 = vunpack.c.h.b16 %v382
        %v905 = vunpack.c.l.b16 %v383
        %v906 = vunpack.c.h.b16 %v383
        %v907 = vunpack.c.l.b16 %v384
        %v908 = vunpack.c.h.b16 %v384
        %v909 = vunpack.c.l.b16 %v385
        %v910 = vunpack.c.h.b16 %v385
        %v911 = vunpack.c.l.b16 %v386
        %v912 = vunpack.c.h.b16 %v386
        %v913 = vunpack.c.l.b16 %v387
        %v914 = vunpack.c.h.b16 %v387
        %v915 = vunpack.c.l.b16 %v388
        %v916 = vunpack.c.h.b16 %v388
        %v917 = vunpack.c.l.b16 %v389
        %v918 = vunpack.c.h.b16 %v389
        %v919 = vunpack.c.l.b16 %v390
        %v920 = vunpack.c.h.b16 %v390
        %v921 = vunpack.c.l.b16 %v391
        %v922 = vunpack.c.h.b16 %v391
        %v923 = vunpack.c.l.b16 %v392
        %v924 = vunpack.c.h.b16 %v392
        %v925 = vunpack.c.l.b16 %v393
        %v926 = vunpack.c.h.b16 %v393
        %v927 = vunpack.c.l.b16 %v394
        %v928 = vunpack.c.h.b16 %v394
        %v929 = vpack.c.b16 %v805, %v801
        %v930 = vpack.c.b16 %v806, %v802
        %v931 = vpack.c.b16 %v807, %v803
        %v932 = vpack.c.b16 %v808, %v804
        %v933 = vpack.c.b16 %v813, %v809
        %v934 = vpack.c.b16 %v814, %v810
        %v935 = vpack.c.b16 %v815, %v811
        %v936 = vpack.c.b16 %v816, %v812
        %v937 = vpack.c.b16 %v821, %v817
        %v938 = vpack.c.b16 %v822, %v818
        %v939 = vpack.c.b16 %v823, %v819
        %v940 = vpack.c.b16 %v824, %v820
        %v941 = vpack.c.b16 %v829, %v825
        %v942 = vpack.c.b16 %v830, %v826
        %v943 = vpack.c.b16 %v831, %v827
        %v944 = vpack.c.b16 %v832, %v828
        %v945 = vpack.c.b16 %v837, %v833
        %v946 = vpack.c.b16 %v838, %v834
        %v947 = vpack.c.b16 %v839, %v835
        %v948 = vpack.c.b16 %v840, %v836
        %v949 = vpack.c.b16 %v845, %v841
        %v950 = vpack.c.b16 %v846, %v842
        %v951 = vpack.c.b16 %v847, %v843
        %v952 = vpack.c.b16 %v848, %v844
        %v953 = vpack.c.b16 %v853, %v849
        %v954 = vpack.c.b16 %v854, %v850
        %v955 = vpack.c.b16 %v855, %v851
        %v956 = vpack.c.b16 %v856, %v852
        %v957 = vpack.c.b16 %v861, %v857
        %v958 = vpack.c.b16 %v862, %v858
        %v959 = vpack.c.b16 %v863, %v859
        %v960 = vpack.c.b16 %v864, %v860
        %v961 = vpack.c.b16 %v869, %v865
        %v962 = vpack.c.b16 %v870, %v866
        %v963 = vpack.c.b16 %v871, %v867
        %v964 = vpack.c.b16 %v872, %v868
        %v965 = vpack.c.b16 %v877, %v873
        %v966 = vpack.c.b16 %v878, %v874
        %v967 = vpack.c.b16 %v879, %v875
        %v968 = vpack.c.b16 %v880, %v876
        %v969 = vpack.c.b16 %v885, %v881
        %v970 = vpack.c.b16 %v886, %v882
        %v971 = vpack.c.b16 %v887, %v883
        %v972 = vpack.c.b16 %v888, %v884
        %v973 = vpack.c.b16 %v893, %v889
        %v974 = vpack.c.b16 %v894, %v890
        %v975 = vpack.c.b16 %v895, %v891
        %v976 = vpack.c.b16 %v896, %v892
        %v977 = vpack.c.b16 %v901, %v897
        %v978 = vpack.c.b16 %v902, %v898
        %v979 = vpack.c.b16 %v903, %v899
        %v980 = vpack.c.b16 %v904, %v900
        %v981 = vpack.c.b16 %v909, %v905
        %v982 = vpack.c.b16 %v910, %v906
        %v983 = vpack.c.b16 %v911, %v907
        %v984 = vpack.c.b16 %v912, %v908
        %v985 = vpack.c.b16 %v917, %v913
        %v986 = vpack.c.b16 %v918, %v914
        %v987 = vpack.c.b16 %v919, %v915
        %v988 = vpack.c.b16 %v920, %v916
        %v989 = vpack.c.b16 %v925, %v921
        %v990 = vpack.c.b16 %v926, %v922
        %v991 = vpack.c.b16 %v927, %v923
        %v992 = vpack.c.b16 %v928, %v924
        %1057 = vmatprep.subr.bf16.mxu0 %v958
        %1058 = vmatpush1.bf16.msra.mxu0 %v957
        %1059 = vmatprep.subr.bf16.mxu0 %v954
        %1060 = vmatpush1.bf16.msra.mxu0 %v953
        %1061 = vmatprep.subr.bf16.mxu0 %v950
        %1062 = vmatpush1.bf16.msra.mxu0 %v949
        %1063 = vmatprep.subr.bf16.mxu0 %v946
        %1064 = vmatpush1.bf16.msra.mxu0 %v945
        %1065 = vmatprep.subr.bf16.mxu0 %v942
        %1066 = vmatpush1.bf16.msra.mxu0 %v941
        %1067 = vmatprep.subr.bf16.mxu0 %v938
        %1068 = vmatpush1.bf16.msra.mxu0 %v937
        %1069 = vmatprep.subr.bf16.mxu0 %v934
        %1070 = vmatpush1.bf16.msra.mxu0 %v933
        %1071 = vmatprep.subr.bf16.mxu0 %v930
        %1072 = vmatpush1.bf16.msra.mxu0 %v929
        %1073 = vmatprep.subr.bf16.mxu0 %v990
        %1074 = vmatpush2.bf16.msra.mxu0 %v989
        %1075 = vmatprep.subr.bf16.mxu0 %v986
        %1076 = vmatpush2.bf16.msra.mxu0 %v985
        %1077 = vmatprep.subr.bf16.mxu0 %v982
        %1078 = vmatpush2.bf16.msra.mxu0 %v981
        %1079 = vmatprep.subr.bf16.mxu0 %v978
        %1080 = vmatpush2.bf16.msra.mxu0 %v977
        %1081 = vmatprep.subr.bf16.mxu0 %v974
        %1082 = vmatpush2.bf16.msra.mxu0 %v973
        %1083 = vmatprep.subr.bf16.mxu0 %v970
        %1084 = vmatpush2.bf16.msra.mxu0 %v969
        %1085 = vmatprep.subr.bf16.mxu0 %v966
        %1086 = vmatpush2.bf16.msra.mxu0 %v965
        %1087 = vmatprep.subr.bf16.mxu0 %v962
        %1088 = vmatpush2.bf16.msra.mxu0 %v961
        %1089 = vmatprep.mubr.bf16.mxu0 %v610
        %1090 = vmatmul.mubr.bf16.gmra.mxu0 %v609
        %v1091 = vpop.f32.mrf.mxu0
        %v1092 = vadd.f32 %v400, %v1091
        %v1093 = vpop.f32.mrf.mxu0
        %v1094 = vadd.f32 %v404, %v1093
        %v1095 = vpop.f32.mrf.mxu0
        %v1096 = vadd.f32 %v400, %v1095
        %v1097 = vpop.f32.mrf.mxu0
        %v1098 = vadd.f32 %v404, %v1097
        %1099 = vmatprep.mubr.bf16.mxu0 %v612
        %1100 = vmatmul.mubr.bf16.gmra.mxu0 %v611
        %v1101 = vpop.f32.mrf.mxu0
        %v1102 = vadd.f32 %v400, %v1101
        %v1103 = vpop.f32.mrf.mxu0
        %v1104 = vadd.f32 %v404, %v1103
        %v1105 = vpop.f32.mrf.mxu0
        %v1106 = vadd.f32 %v400, %v1105
        %v1107 = vpop.f32.mrf.mxu0
        %v1108 = vadd.f32 %v404, %v1107
        %1109 = vmatprep.mubr.bf16.mxu0 %v614
        %1110 = vmatmul.mubr.bf16.gmra.mxu0 %v613
        %v1111 = vpop.f32.mrf.mxu0
        %v1112 = vadd.f32 %v400, %v1111
        %v1113 = vpop.f32.mrf.mxu0
        %v1114 = vadd.f32 %v404, %v1113
        %v1115 = vpop.f32.mrf.mxu0
        %v1116 = vadd.f32 %v400, %v1115
        %v1117 = vpop.f32.mrf.mxu0
        %v1118 = vadd.f32 %v404, %v1117
        %1119 = vmatprep.mubr.bf16.mxu0 %v616
        %1120 = vmatmul.mubr.bf16.gmra.mxu0 %v615
        %v1121 = vpop.f32.mrf.mxu0
        %v1122 = vadd.f32 %v400, %v1121
        %v1123 = vpop.f32.mrf.mxu0
        %v1124 = vadd.f32 %v404, %v1123
        %v1125 = vpop.f32.mrf.mxu0
        %v1126 = vadd.f32 %v400, %v1125
        %v1127 = vpop.f32.mrf.mxu0
        %v1128 = vadd.f32 %v404, %v1127
        %1129 = vmatprep.mubr.bf16.mxu0 %v618
        %1130 = vmatmul.mubr.bf16.gmra.mxu0 %v617
        %v1131 = vpop.f32.mrf.mxu0
        %v1132 = vadd.f32 %v400, %v1131
        %v1133 = vpop.f32.mrf.mxu0
        %v1134 = vadd.f32 %v404, %v1133
        %v1135 = vpop.f32.mrf.mxu0
        %v1136 = vadd.f32 %v400, %v1135
        %v1137 = vpop.f32.mrf.mxu0
        %v1138 = vadd.f32 %v404, %v1137
        %1139 = vmatprep.mubr.bf16.mxu0 %v620
        %1140 = vmatmul.mubr.bf16.gmra.mxu0 %v619
        %v1141 = vpop.f32.mrf.mxu0
        %v1142 = vadd.f32 %v400, %v1141
        %v1143 = vpop.f32.mrf.mxu0
        %v1144 = vadd.f32 %v404, %v1143
        %v1145 = vpop.f32.mrf.mxu0
        %v1146 = vadd.f32 %v400, %v1145
        %v1147 = vpop.f32.mrf.mxu0
        %v1148 = vadd.f32 %v404, %v1147
        %1149 = vmatprep.mubr.bf16.mxu0 %v622
        %1150 = vmatmul.mubr.bf16.gmra.mxu0 %v621
        %v1151 = vpop.f32.mrf.mxu0
        %v1152 = vadd.f32 %v400, %v1151
        %v1153 = vpop.f32.mrf.mxu0
        %v1154 = vadd.f32 %v404, %v1153
        %v1155 = vpop.f32.mrf.mxu0
        %v1156 = vadd.f32 %v400, %v1155
        %v1157 = vpop.f32.mrf.mxu0
        %v1158 = vadd.f32 %v404, %v1157
        %1159 = vmatprep.mubr.bf16.mxu0 %v624
        %1160 = vmatmul.mubr.bf16.gmra.mxu0 %v623
        %v1161 = vpop.f32.mrf.mxu0
        %v1162 = vadd.f32 %v400, %v1161
        %v1163 = vpop.f32.mrf.mxu0
        %v1164 = vadd.f32 %v404, %v1163
        %v1165 = vpop.f32.mrf.mxu0
        %v1166 = vadd.f32 %v400, %v1165
        %v1167 = vpop.f32.mrf.mxu0
        %v1168 = vadd.f32 %v404, %v1167
        %1169 = vmatprep.mubr.bf16.mxu0 %v626
        %1170 = vmatmul.mubr.bf16.gmra.mxu0 %v625
        %v1171 = vpop.f32.mrf.mxu0
        %v1172 = vadd.f32 %v400, %v1171
        %v1173 = vpop.f32.mrf.mxu0
        %v1174 = vadd.f32 %v404, %v1173
        %v1175 = vpop.f32.mrf.mxu0
        %v1176 = vadd.f32 %v400, %v1175
        %v1177 = vpop.f32.mrf.mxu0
        %v1178 = vadd.f32 %v404, %v1177
        %1179 = vmatprep.mubr.bf16.mxu0 %v628
        %1180 = vmatmul.mubr.bf16.gmra.mxu0 %v627
        %v1181 = vpop.f32.mrf.mxu0
        %v1182 = vadd.f32 %v400, %v1181
        %v1183 = vpop.f32.mrf.mxu0
        %v1184 = vadd.f32 %v404, %v1183
        %v1185 = vpop.f32.mrf.mxu0
        %v1186 = vadd.f32 %v400, %v1185
        %v1187 = vpop.f32.mrf.mxu0
        %v1188 = vadd.f32 %v404, %v1187
        %1189 = vmatprep.mubr.bf16.mxu0 %v630
        %1190 = vmatmul.mubr.bf16.gmra.mxu0 %v629
        %v1191 = vpop.f32.mrf.mxu0
        %v1192 = vadd.f32 %v400, %v1191
        %v1193 = vpop.f32.mrf.mxu0
        %v1194 = vadd.f32 %v404, %v1193
        %v1195 = vpop.f32.mrf.mxu0
        %v1196 = vadd.f32 %v400, %v1195
        %v1197 = vpop.f32.mrf.mxu0
        %v1198 = vadd.f32 %v404, %v1197
        %1199 = vmatprep.mubr.bf16.mxu0 %v632
        %1200 = vmatmul.mubr.bf16.gmra.mxu0 %v631
        %v1201 = vpop.f32.mrf.mxu0
        %v1202 = vadd.f32 %v400, %v1201
        %v1203 = vpop.f32.mrf.mxu0
        %v1204 = vadd.f32 %v404, %v1203
        %v1205 = vpop.f32.mrf.mxu0
        %v1206 = vadd.f32 %v400, %v1205
        %v1207 = vpop.f32.mrf.mxu0
        %v1208 = vadd.f32 %v404, %v1207
        %1209 = vmatprep.mubr.bf16.mxu0 %v634
        %1210 = vmatmul.mubr.bf16.gmra.mxu0 %v633
        %v1211 = vpop.f32.mrf.mxu0
        %v1212 = vadd.f32 %v400, %v1211
        %v1213 = vpop.f32.mrf.mxu0
        %v1214 = vadd.f32 %v404, %v1213
        %v1215 = vpop.f32.mrf.mxu0
        %v1216 = vadd.f32 %v400, %v1215
        %v1217 = vpop.f32.mrf.mxu0
        %v1218 = vadd.f32 %v404, %v1217
        %1219 = vmatprep.mubr.bf16.mxu0 %v636
        %1220 = vmatmul.mubr.bf16.gmra.mxu0 %v635
        %v1221 = vpop.f32.mrf.mxu0
        %v1222 = vadd.f32 %v400, %v1221
        %v1223 = vpop.f32.mrf.mxu0
        %v1224 = vadd.f32 %v404, %v1223
        %v1225 = vpop.f32.mrf.mxu0
        %v1226 = vadd.f32 %v400, %v1225
        %v1227 = vpop.f32.mrf.mxu0
        %v1228 = vadd.f32 %v404, %v1227
        %1229 = vmatprep.mubr.bf16.mxu0 %v638
        %1230 = vmatmul.mubr.bf16.gmra.mxu0 %v637
        %v1231 = vpop.f32.mrf.mxu0
        %v1232 = vadd.f32 %v400, %v1231
        %v1233 = vpop.f32.mrf.mxu0
        %v1234 = vadd.f32 %v404, %v1233
        %v1235 = vpop.f32.mrf.mxu0
        %v1236 = vadd.f32 %v400, %v1235
        %v1237 = vpop.f32.mrf.mxu0
        %v1238 = vadd.f32 %v404, %v1237
        %1239 = vmatprep.mubr.bf16.mxu0 %v640
        %1240 = vmatmul.mubr.bf16.gmra.mxu0 %v639
        %v1241 = vpop.f32.mrf.mxu0
        %v1242 = vadd.f32 %v400, %v1241
        %v1243 = vpop.f32.mrf.mxu0
        %v1244 = vadd.f32 %v404, %v1243
        %v1245 = vpop.f32.mrf.mxu0
        %v1246 = vadd.f32 %v400, %v1245
        %v1247 = vpop.f32.mrf.mxu0
        %v1248 = vadd.f32 %v404, %v1247
        %1249 = vmatprep.mubr.bf16.mxu0 %v642
        %1250 = vmatmul.mubr.bf16.gmra.mxu0 %v641
        %v1251 = vpop.f32.mrf.mxu0
        %v1252 = vadd.f32 %v400, %v1251
        %v1253 = vpop.f32.mrf.mxu0
        %v1254 = vadd.f32 %v404, %v1253
        %v1255 = vpop.f32.mrf.mxu0
        %v1256 = vadd.f32 %v400, %v1255
        %v1257 = vpop.f32.mrf.mxu0
        %v1258 = vadd.f32 %v404, %v1257
        %1259 = vmatprep.mubr.bf16.mxu0 %v644
        %1260 = vmatmul.mubr.bf16.gmra.mxu0 %v643
        %v1261 = vpop.f32.mrf.mxu0
        %v1262 = vadd.f32 %v400, %v1261
        %v1263 = vpop.f32.mrf.mxu0
        %v1264 = vadd.f32 %v404, %v1263
        %v1265 = vpop.f32.mrf.mxu0
        %v1266 = vadd.f32 %v400, %v1265
        %v1267 = vpop.f32.mrf.mxu0
        %v1268 = vadd.f32 %v404, %v1267
        %1269 = vmatprep.mubr.bf16.mxu0 %v646
        %1270 = vmatmul.mubr.bf16.gmra.mxu0 %v645
        %v1271 = vpop.f32.mrf.mxu0
        %v1272 = vadd.f32 %v400, %v1271
        %v1273 = vpop.f32.mrf.mxu0
        %v1274 = vadd.f32 %v404, %v1273
        %v1275 = vpop.f32.mrf.mxu0
        %v1276 = vadd.f32 %v400, %v1275
        %v1277 = vpop.f32.mrf.mxu0
        %v1278 = vadd.f32 %v404, %v1277
        %1279 = vmatprep.mubr.bf16.mxu0 %v648
        %1280 = vmatmul.mubr.bf16.gmra.mxu0 %v647
        %v1281 = vpop.f32.mrf.mxu0
        %v1282 = vadd.f32 %v400, %v1281
        %v1283 = vpop.f32.mrf.mxu0
        %v1284 = vadd.f32 %v404, %v1283
        %v1285 = vpop.f32.mrf.mxu0
        %v1286 = vadd.f32 %v400, %v1285
        %v1287 = vpop.f32.mrf.mxu0
        %v1288 = vadd.f32 %v404, %v1287
        %1289 = vmatprep.mubr.bf16.mxu0 %v650
        %1290 = vmatmul.mubr.bf16.gmra.mxu0 %v649
        %v1291 = vpop.f32.mrf.mxu0
        %v1292 = vadd.f32 %v400, %v1291
        %v1293 = vpop.f32.mrf.mxu0
        %v1294 = vadd.f32 %v404, %v1293
        %v1295 = vpop.f32.mrf.mxu0
        %v1296 = vadd.f32 %v400, %v1295
        %v1297 = vpop.f32.mrf.mxu0
        %v1298 = vadd.f32 %v404, %v1297
        %1299 = vmatprep.mubr.bf16.mxu0 %v652
        %1300 = vmatmul.mubr.bf16.gmra.mxu0 %v651
        %v1301 = vpop.f32.mrf.mxu0
        %v1302 = vadd.f32 %v400, %v1301
        %v1303 = vpop.f32.mrf.mxu0
        %v1304 = vadd.f32 %v404, %v1303
        %v1305 = vpop.f32.mrf.mxu0
        %v1306 = vadd.f32 %v400, %v1305
        %v1307 = vpop.f32.mrf.mxu0
        %v1308 = vadd.f32 %v404, %v1307
        %1309 = vmatprep.mubr.bf16.mxu0 %v654
        %1310 = vmatmul.mubr.bf16.gmra.mxu0 %v653
        %v1311 = vpop.f32.mrf.mxu0
        %v1312 = vadd.f32 %v400, %v1311
        %v1313 = vpop.f32.mrf.mxu0
        %v1314 = vadd.f32 %v404, %v1313
        %v1315 = vpop.f32.mrf.mxu0
        %v1316 = vadd.f32 %v400, %v1315
        %v1317 = vpop.f32.mrf.mxu0
        %v1318 = vadd.f32 %v404, %v1317
        %1319 = vmatprep.mubr.bf16.mxu0 %v656
        %1320 = vmatmul.mubr.bf16.gmra.mxu0 %v655
        %v1321 = vpop.f32.mrf.mxu0
        %v1322 = vadd.f32 %v400, %v1321
        %v1323 = vpop.f32.mrf.mxu0
        %v1324 = vadd.f32 %v404, %v1323
        %v1325 = vpop.f32.mrf.mxu0
        %v1326 = vadd.f32 %v400, %v1325
        %v1327 = vpop.f32.mrf.mxu0
        %v1328 = vadd.f32 %v404, %v1327
        %1329 = vmatprep.mubr.bf16.mxu0 %v658
        %1330 = vmatmul.mubr.bf16.gmra.mxu0 %v657
        %v1331 = vpop.f32.mrf.mxu0
        %v1332 = vadd.f32 %v400, %v1331
        %v1333 = vpop.f32.mrf.mxu0
        %v1334 = vadd.f32 %v404, %v1333
        %v1335 = vpop.f32.mrf.mxu0
        %v1336 = vadd.f32 %v400, %v1335
        %v1337 = vpop.f32.mrf.mxu0
        %v1338 = vadd.f32 %v404, %v1337
        %1339 = vmatprep.mubr.bf16.mxu0 %v660
        %1340 = vmatmul.mubr.bf16.gmra.mxu0 %v659
        %v1341 = vpop.f32.mrf.mxu0
        %v1342 = vadd.f32 %v400, %v1341
        %v1343 = vpop.f32.mrf.mxu0
        %v1344 = vadd.f32 %v404, %v1343
        %v1345 = vpop.f32.mrf.mxu0
        %v1346 = vadd.f32 %v400, %v1345
        %v1347 = vpop.f32.mrf.mxu0
        %v1348 = vadd.f32 %v404, %v1347
        %1349 = vmatprep.mubr.bf16.mxu0 %v662
        %1350 = vmatmul.mubr.bf16.gmra.mxu0 %v661
        %v1351 = vpop.f32.mrf.mxu0
        %v1352 = vadd.f32 %v400, %v1351
        %v1353 = vpop.f32.mrf.mxu0
        %v1354 = vadd.f32 %v404, %v1353
        %v1355 = vpop.f32.mrf.mxu0
        %v1356 = vadd.f32 %v400, %v1355
        %v1357 = vpop.f32.mrf.mxu0
        %v1358 = vadd.f32 %v404, %v1357
        %1359 = vmatprep.mubr.bf16.mxu0 %v664
        %1360 = vmatmul.mubr.bf16.gmra.mxu0 %v663
        %v1361 = vpop.f32.mrf.mxu0
        %v1362 = vadd.f32 %v400, %v1361
        %v1363 = vpop.f32.mrf.mxu0
        %v1364 = vadd.f32 %v404, %v1363
        %v1365 = vpop.f32.mrf.mxu0
        %v1366 = vadd.f32 %v400, %v1365
        %v1367 = vpop.f32.mrf.mxu0
        %v1368 = vadd.f32 %v404, %v1367
        %1369 = vmatprep.mubr.bf16.mxu0 %v666
        %1370 = vmatmul.mubr.bf16.gmra.mxu0 %v665
        %v1371 = vpop.f32.mrf.mxu0
        %v1372 = vadd.f32 %v400, %v1371
        %v1373 = vpop.f32.mrf.mxu0
        %v1374 = vadd.f32 %v404, %v1373
        %v1375 = vpop.f32.mrf.mxu0
        %v1376 = vadd.f32 %v400, %v1375
        %v1377 = vpop.f32.mrf.mxu0
        %v1378 = vadd.f32 %v404, %v1377
        %1379 = vmatprep.mubr.bf16.mxu0 %v668
        %1380 = vmatmul.mubr.bf16.gmra.mxu0 %v667
        %v1381 = vpop.f32.mrf.mxu0
        %v1382 = vadd.f32 %v400, %v1381
        %v1383 = vpop.f32.mrf.mxu0
        %v1384 = vadd.f32 %v404, %v1383
        %v1385 = vpop.f32.mrf.mxu0
        %v1386 = vadd.f32 %v400, %v1385
        %v1387 = vpop.f32.mrf.mxu0
        %v1388 = vadd.f32 %v404, %v1387
        %1389 = vmatprep.mubr.bf16.mxu0 %v670
        %1390 = vmatmul.mubr.bf16.gmra.mxu0 %v669
        %v1391 = vpop.f32.mrf.mxu0
        %v1392 = vadd.f32 %v400, %v1391
        %v1393 = vpop.f32.mrf.mxu0
        %v1394 = vadd.f32 %v404, %v1393
        %v1395 = vpop.f32.mrf.mxu0
        %v1396 = vadd.f32 %v400, %v1395
        %v1397 = vpop.f32.mrf.mxu0
        %v1398 = vadd.f32 %v404, %v1397
        %1399 = vmatprep.mubr.bf16.mxu0 %v672
        %1400 = vmatmul.mubr.bf16.gmra.mxu0 %v671
        %v1401 = vpop.f32.mrf.mxu0
        %v1402 = vadd.f32 %v400, %v1401
        %v1403 = vpop.f32.mrf.mxu0
        %v1404 = vadd.f32 %v404, %v1403
        %v1405 = vpop.f32.mrf.mxu0
        %v1406 = vadd.f32 %v400, %v1405
        %v1407 = vpop.f32.mrf.mxu0
        %v1408 = vadd.f32 %v404, %v1407
        %1409 = vdwg.mxu0
        %1410 = vmatprep.subr.bf16.mxu0 %v960
        %1411 = vmatpush1.bf16.msra.mxu0 %v959
        %1412 = vmatprep.subr.bf16.mxu0 %v956
        %1413 = vmatpush1.bf16.msra.mxu0 %v955
        %1414 = vmatprep.subr.bf16.mxu0 %v952
        %1415 = vmatpush1.bf16.msra.mxu0 %v951
        %1416 = vmatprep.subr.bf16.mxu0 %v948
        %1417 = vmatpush1.bf16.msra.mxu0 %v947
        %1418 = vmatprep.subr.bf16.mxu0 %v944
        %1419 = vmatpush1.bf16.msra.mxu0 %v943
        %1420 = vmatprep.subr.bf16.mxu0 %v940
        %1421 = vmatpush1.bf16.msra.mxu0 %v939
        %1422 = vmatprep.subr.bf16.mxu0 %v936
        %1423 = vmatpush1.bf16.msra.mxu0 %v935
        %1424 = vmatprep.subr.bf16.mxu0 %v932
        %1425 = vmatpush1.bf16.msra.mxu0 %v931
        %1426 = vmatprep.subr.bf16.mxu0 %v992
        %1427 = vmatpush2.bf16.msra.mxu0 %v991
        %1428 = vmatprep.subr.bf16.mxu0 %v988
        %1429 = vmatpush2.bf16.msra.mxu0 %v987
        %1430 = vmatprep.subr.bf16.mxu0 %v984
        %1431 = vmatpush2.bf16.msra.mxu0 %v983
        %1432 = vmatprep.subr.bf16.mxu0 %v980
        %1433 = vmatpush2.bf16.msra.mxu0 %v979
        %1434 = vmatprep.subr.bf16.mxu0 %v976
        %1435 = vmatpush2.bf16.msra.mxu0 %v975
        %1436 = vmatprep.subr.bf16.mxu0 %v972
        %1437 = vmatpush2.bf16.msra.mxu0 %v971
        %1438 = vmatprep.subr.bf16.mxu0 %v968
        %1439 = vmatpush2.bf16.msra.mxu0 %v967
        %1440 = vmatprep.subr.bf16.mxu0 %v964
        %1441 = vmatpush2.bf16.msra.mxu0 %v963
        %1442 = vmatprep.mubr.bf16.mxu0 %v610
        %1443 = vmatmul.mubr.bf16.gmra.mxu0 %v609
        %v1444 = vpop.f32.mrf.mxu0
        %v1445 = vadd.f32 %v408, %v1444
        %v1446 = vpop.f32.mrf.mxu0
        %v1447 = vadd.f32 %v412, %v1446
        %v1448 = vpop.f32.mrf.mxu0
        %v1449 = vadd.f32 %v408, %v1448
        %v1450 = vpop.f32.mrf.mxu0
        %v1451 = vadd.f32 %v412, %v1450
        %1452 = vmatprep.mubr.bf16.mxu0 %v612
        %1453 = vmatmul.mubr.bf16.gmra.mxu0 %v611
        %v1454 = vpop.f32.mrf.mxu0
        %v1455 = vadd.f32 %v408, %v1454
        %v1456 = vpop.f32.mrf.mxu0
        %v1457 = vadd.f32 %v412, %v1456
        %v1458 = vpop.f32.mrf.mxu0
        %v1459 = vadd.f32 %v408, %v1458
        %v1460 = vpop.f32.mrf.mxu0
        %v1461 = vadd.f32 %v412, %v1460
        %1462 = vmatprep.mubr.bf16.mxu0 %v614
        %1463 = vmatmul.mubr.bf16.gmra.mxu0 %v613
        %v1464 = vpop.f32.mrf.mxu0
        %v1465 = vadd.f32 %v408, %v1464
        %v1466 = vpop.f32.mrf.mxu0
        %v1467 = vadd.f32 %v412, %v1466
        %v1468 = vpop.f32.mrf.mxu0
        %v1469 = vadd.f32 %v408, %v1468
        %v1470 = vpop.f32.mrf.mxu0
        %v1471 = vadd.f32 %v412, %v1470
        %1472 = vmatprep.mubr.bf16.mxu0 %v616
        %1473 = vmatmul.mubr.bf16.gmra.mxu0 %v615
        %v1474 = vpop.f32.mrf.mxu0
        %v1475 = vadd.f32 %v408, %v1474
        %v1476 = vpop.f32.mrf.mxu0
        %v1477 = vadd.f32 %v412, %v1476
        %v1478 = vpop.f32.mrf.mxu0
        %v1479 = vadd.f32 %v408, %v1478
        %v1480 = vpop.f32.mrf.mxu0
        %v1481 = vadd.f32 %v412, %v1480
        %1482 = vmatprep.mubr.bf16.mxu0 %v618
        %1483 = vmatmul.mubr.bf16.gmra.mxu0 %v617
        %v1484 = vpop.f32.mrf.mxu0
        %v1485 = vadd.f32 %v408, %v1484
        %v1486 = vpop.f32.mrf.mxu0
        %v1487 = vadd.f32 %v412, %v1486
        %v1488 = vpop.f32.mrf.mxu0
        %v1489 = vadd.f32 %v408, %v1488
        %v1490 = vpop.f32.mrf.mxu0
        %v1491 = vadd.f32 %v412, %v1490
        %1492 = vmatprep.mubr.bf16.mxu0 %v620
        %1493 = vmatmul.mubr.bf16.gmra.mxu0 %v619
        %v1494 = vpop.f32.mrf.mxu0
        %v1495 = vadd.f32 %v408, %v1494
        %v1496 = vpop.f32.mrf.mxu0
        %v1497 = vadd.f32 %v412, %v1496
        %v1498 = vpop.f32.mrf.mxu0
        %v1499 = vadd.f32 %v408, %v1498
        %v1500 = vpop.f32.mrf.mxu0
        %v1501 = vadd.f32 %v412, %v1500
        %1502 = vmatprep.mubr.bf16.mxu0 %v622
        %1503 = vmatmul.mubr.bf16.gmra.mxu0 %v621
        %v1504 = vpop.f32.mrf.mxu0
        %v1505 = vadd.f32 %v408, %v1504
        %v1506 = vpop.f32.mrf.mxu0
        %v1507 = vadd.f32 %v412, %v1506
        %v1508 = vpop.f32.mrf.mxu0
        %v1509 = vadd.f32 %v408, %v1508
        %v1510 = vpop.f32.mrf.mxu0
        %v1511 = vadd.f32 %v412, %v1510
        %1512 = vmatprep.mubr.bf16.mxu0 %v624
        %1513 = vmatmul.mubr.bf16.gmra.mxu0 %v623
        %v1514 = vpop.f32.mrf.mxu0
        %v1515 = vadd.f32 %v408, %v1514
        %v1516 = vpop.f32.mrf.mxu0
        %v1517 = vadd.f32 %v412, %v1516
        %v1518 = vpop.f32.mrf.mxu0
        %v1519 = vadd.f32 %v408, %v1518
        %v1520 = vpop.f32.mrf.mxu0
        %v1521 = vadd.f32 %v412, %v1520
        %1522 = vmatprep.mubr.bf16.mxu0 %v626
        %1523 = vmatmul.mubr.bf16.gmra.mxu0 %v625
        %v1524 = vpop.f32.mrf.mxu0
        %v1525 = vadd.f32 %v408, %v1524
        %v1526 = vpop.f32.mrf.mxu0
        %v1527 = vadd.f32 %v412, %v1526
        %v1528 = vpop.f32.mrf.mxu0
        %v1529 = vadd.f32 %v408, %v1528
        %v1530 = vpop.f32.mrf.mxu0
        %v1531 = vadd.f32 %v412, %v1530
        %1532 = vmatprep.mubr.bf16.mxu0 %v628
        %1533 = vmatmul.mubr.bf16.gmra.mxu0 %v627
        %v1534 = vpop.f32.mrf.mxu0
        %v1535 = vadd.f32 %v408, %v1534
        %v1536 = vpop.f32.mrf.mxu0
        %v1537 = vadd.f32 %v412, %v1536
        %v1538 = vpop.f32.mrf.mxu0
        %v1539 = vadd.f32 %v408, %v1538
        %v1540 = vpop.f32.mrf.mxu0
        %v1541 = vadd.f32 %v412, %v1540
        %1542 = vmatprep.mubr.bf16.mxu0 %v630
        %1543 = vmatmul.mubr.bf16.gmra.mxu0 %v629
        %v1544 = vpop.f32.mrf.mxu0
        %v1545 = vadd.f32 %v408, %v1544
        %v1546 = vpop.f32.mrf.mxu0
        %v1547 = vadd.f32 %v412, %v1546
        %v1548 = vpop.f32.mrf.mxu0
        %v1549 = vadd.f32 %v408, %v1548
        %v1550 = vpop.f32.mrf.mxu0
        %v1551 = vadd.f32 %v412, %v1550
        %1552 = vmatprep.mubr.bf16.mxu0 %v632
        %1553 = vmatmul.mubr.bf16.gmra.mxu0 %v631
        %v1554 = vpop.f32.mrf.mxu0
        %v1555 = vadd.f32 %v408, %v1554
        %v1556 = vpop.f32.mrf.mxu0
        %v1557 = vadd.f32 %v412, %v1556
        %v1558 = vpop.f32.mrf.mxu0
        %v1559 = vadd.f32 %v408, %v1558
        %v1560 = vpop.f32.mrf.mxu0
        %v1561 = vadd.f32 %v412, %v1560
        %1562 = vmatprep.mubr.bf16.mxu0 %v634
        %1563 = vmatmul.mubr.bf16.gmra.mxu0 %v633
        %v1564 = vpop.f32.mrf.mxu0
        %v1565 = vadd.f32 %v408, %v1564
        %v1566 = vpop.f32.mrf.mxu0
        %v1567 = vadd.f32 %v412, %v1566
        %v1568 = vpop.f32.mrf.mxu0
        %v1569 = vadd.f32 %v408, %v1568
        %v1570 = vpop.f32.mrf.mxu0
        %v1571 = vadd.f32 %v412, %v1570
        %1572 = vmatprep.mubr.bf16.mxu0 %v636
        %1573 = vmatmul.mubr.bf16.gmra.mxu0 %v635
        %v1574 = vpop.f32.mrf.mxu0
        %v1575 = vadd.f32 %v408, %v1574
        %v1576 = vpop.f32.mrf.mxu0
        %v1577 = vadd.f32 %v412, %v1576
        %v1578 = vpop.f32.mrf.mxu0
        %v1579 = vadd.f32 %v408, %v1578
        %v1580 = vpop.f32.mrf.mxu0
        %v1581 = vadd.f32 %v412, %v1580
        %1582 = vmatprep.mubr.bf16.mxu0 %v638
        %1583 = vmatmul.mubr.bf16.gmra.mxu0 %v637
        %v1584 = vpop.f32.mrf.mxu0
        %v1585 = vadd.f32 %v408, %v1584
        %v1586 = vpop.f32.mrf.mxu0
        %v1587 = vadd.f32 %v412, %v1586
        %v1588 = vpop.f32.mrf.mxu0
        %v1589 = vadd.f32 %v408, %v1588
        %v1590 = vpop.f32.mrf.mxu0
        %v1591 = vadd.f32 %v412, %v1590
        %1592 = vmatprep.mubr.bf16.mxu0 %v640
        %1593 = vmatmul.mubr.bf16.gmra.mxu0 %v639
        %v1594 = vpop.f32.mrf.mxu0
        %v1595 = vadd.f32 %v408, %v1594
        %v1596 = vpop.f32.mrf.mxu0
        %v1597 = vadd.f32 %v412, %v1596
        %v1598 = vpop.f32.mrf.mxu0
        %v1599 = vadd.f32 %v408, %v1598
        %v1600 = vpop.f32.mrf.mxu0
        %v1601 = vadd.f32 %v412, %v1600
        %1602 = vmatprep.mubr.bf16.mxu0 %v642
        %1603 = vmatmul.mubr.bf16.gmra.mxu0 %v641
        %v1604 = vpop.f32.mrf.mxu0
        %v1605 = vadd.f32 %v408, %v1604
        %v1606 = vpop.f32.mrf.mxu0
        %v1607 = vadd.f32 %v412, %v1606
        %v1608 = vpop.f32.mrf.mxu0
        %v1609 = vadd.f32 %v408, %v1608
        %v1610 = vpop.f32.mrf.mxu0
        %v1611 = vadd.f32 %v412, %v1610
        %1612 = vmatprep.mubr.bf16.mxu0 %v644
        %1613 = vmatmul.mubr.bf16.gmra.mxu0 %v643
        %v1614 = vpop.f32.mrf.mxu0
        %v1615 = vadd.f32 %v408, %v1614
        %v1616 = vpop.f32.mrf.mxu0
        %v1617 = vadd.f32 %v412, %v1616
        %v1618 = vpop.f32.mrf.mxu0
        %v1619 = vadd.f32 %v408, %v1618
        %v1620 = vpop.f32.mrf.mxu0
        %v1621 = vadd.f32 %v412, %v1620
        %1622 = vmatprep.mubr.bf16.mxu0 %v646
        %1623 = vmatmul.mubr.bf16.gmra.mxu0 %v645
        %v1624 = vpop.f32.mrf.mxu0
        %v1625 = vadd.f32 %v408, %v1624
        %v1626 = vpop.f32.mrf.mxu0
        %v1627 = vadd.f32 %v412, %v1626
        %v1628 = vpop.f32.mrf.mxu0
        %v1629 = vadd.f32 %v408, %v1628
        %v1630 = vpop.f32.mrf.mxu0
        %v1631 = vadd.f32 %v412, %v1630
        %1632 = vmatprep.mubr.bf16.mxu0 %v648
        %1633 = vmatmul.mubr.bf16.gmra.mxu0 %v647
        %v1634 = vpop.f32.mrf.mxu0
        %v1635 = vadd.f32 %v408, %v1634
        %v1636 = vpop.f32.mrf.mxu0
        %v1637 = vadd.f32 %v412, %v1636
        %v1638 = vpop.f32.mrf.mxu0
        %v1639 = vadd.f32 %v408, %v1638
        %v1640 = vpop.f32.mrf.mxu0
        %v1641 = vadd.f32 %v412, %v1640
        %1642 = vmatprep.mubr.bf16.mxu0 %v650
        %1643 = vmatmul.mubr.bf16.gmra.mxu0 %v649
        %v1644 = vpop.f32.mrf.mxu0
        %v1645 = vadd.f32 %v408, %v1644
        %v1646 = vpop.f32.mrf.mxu0
        %v1647 = vadd.f32 %v412, %v1646
        %v1648 = vpop.f32.mrf.mxu0
        %v1649 = vadd.f32 %v408, %v1648
        %v1650 = vpop.f32.mrf.mxu0
        %v1651 = vadd.f32 %v412, %v1650
        %1652 = vmatprep.mubr.bf16.mxu0 %v652
        %1653 = vmatmul.mubr.bf16.gmra.mxu0 %v651
        %v1654 = vpop.f32.mrf.mxu0
        %v1655 = vadd.f32 %v408, %v1654
        %v1656 = vpop.f32.mrf.mxu0
        %v1657 = vadd.f32 %v412, %v1656
        %v1658 = vpop.f32.mrf.mxu0
        %v1659 = vadd.f32 %v408, %v1658
        %v1660 = vpop.f32.mrf.mxu0
        %v1661 = vadd.f32 %v412, %v1660
        %1662 = vmatprep.mubr.bf16.mxu0 %v654
        %1663 = vmatmul.mubr.bf16.gmra.mxu0 %v653
        %v1664 = vpop.f32.mrf.mxu0
        %v1665 = vadd.f32 %v408, %v1664
        %v1666 = vpop.f32.mrf.mxu0
        %v1667 = vadd.f32 %v412, %v1666
        %v1668 = vpop.f32.mrf.mxu0
        %v1669 = vadd.f32 %v408, %v1668
        %v1670 = vpop.f32.mrf.mxu0
        %v1671 = vadd.f32 %v412, %v1670
        %1672 = vmatprep.mubr.bf16.mxu0 %v656
        %1673 = vmatmul.mubr.bf16.gmra.mxu0 %v655
        %v1674 = vpop.f32.mrf.mxu0
        %v1675 = vadd.f32 %v408, %v1674
        %v1676 = vpop.f32.mrf.mxu0
        %v1677 = vadd.f32 %v412, %v1676
        %v1678 = vpop.f32.mrf.mxu0
        %v1679 = vadd.f32 %v408, %v1678
        %v1680 = vpop.f32.mrf.mxu0
        %v1681 = vadd.f32 %v412, %v1680
        %1682 = vmatprep.mubr.bf16.mxu0 %v658
        %1683 = vmatmul.mubr.bf16.gmra.mxu0 %v657
        %v1684 = vpop.f32.mrf.mxu0
        %v1685 = vadd.f32 %v408, %v1684
        %v1686 = vpop.f32.mrf.mxu0
        %v1687 = vadd.f32 %v412, %v1686
        %v1688 = vpop.f32.mrf.mxu0
        %v1689 = vadd.f32 %v408, %v1688
        %v1690 = vpop.f32.mrf.mxu0
        %v1691 = vadd.f32 %v412, %v1690
        %1692 = vmatprep.mubr.bf16.mxu0 %v660
        %1693 = vmatmul.mubr.bf16.gmra.mxu0 %v659
        %v1694 = vpop.f32.mrf.mxu0
        %v1695 = vadd.f32 %v408, %v1694
        %v1696 = vpop.f32.mrf.mxu0
        %v1697 = vadd.f32 %v412, %v1696
        %v1698 = vpop.f32.mrf.mxu0
        %v1699 = vadd.f32 %v408, %v1698
        %v1700 = vpop.f32.mrf.mxu0
        %v1701 = vadd.f32 %v412, %v1700
        %1702 = vmatprep.mubr.bf16.mxu0 %v662
        %1703 = vmatmul.mubr.bf16.gmra.mxu0 %v661
        %v1704 = vpop.f32.mrf.mxu0
        %v1705 = vadd.f32 %v408, %v1704
        %v1706 = vpop.f32.mrf.mxu0
        %v1707 = vadd.f32 %v412, %v1706
        %v1708 = vpop.f32.mrf.mxu0
        %v1709 = vadd.f32 %v408, %v1708
        %v1710 = vpop.f32.mrf.mxu0
        %v1711 = vadd.f32 %v412, %v1710
        %1712 = vmatprep.mubr.bf16.mxu0 %v664
        %1713 = vmatmul.mubr.bf16.gmra.mxu0 %v663
        %v1714 = vpop.f32.mrf.mxu0
        %v1715 = vadd.f32 %v408, %v1714
        %v1716 = vpop.f32.mrf.mxu0
        %v1717 = vadd.f32 %v412, %v1716
        %v1718 = vpop.f32.mrf.mxu0
        %v1719 = vadd.f32 %v408, %v1718
        %v1720 = vpop.f32.mrf.mxu0
        %v1721 = vadd.f32 %v412, %v1720
        %1722 = vmatprep.mubr.bf16.mxu0 %v666
        %1723 = vmatmul.mubr.bf16.gmra.mxu0 %v665
        %v1724 = vpop.f32.mrf.mxu0
        %v1725 = vadd.f32 %v408, %v1724
        %v1726 = vpop.f32.mrf.mxu0
        %v1727 = vadd.f32 %v412, %v1726
        %v1728 = vpop.f32.mrf.mxu0
        %v1729 = vadd.f32 %v408, %v1728
        %v1730 = vpop.f32.mrf.mxu0
        %v1731 = vadd.f32 %v412, %v1730
        %1732 = vmatprep.mubr.bf16.mxu0 %v668
        %1733 = vmatmul.mubr.bf16.gmra.mxu0 %v667
        %v1734 = vpop.f32.mrf.mxu0
        %v1735 = vadd.f32 %v408, %v1734
        %v1736 = vpop.f32.mrf.mxu0
        %v1737 = vadd.f32 %v412, %v1736
        %v1738 = vpop.f32.mrf.mxu0
        %v1739 = vadd.f32 %v408, %v1738
        %v1740 = vpop.f32.mrf.mxu0
        %v1741 = vadd.f32 %v412, %v1740
        %1742 = vmatprep.mubr.bf16.mxu0 %v670
        %1743 = vmatmul.mubr.bf16.gmra.mxu0 %v669
        %v1744 = vpop.f32.mrf.mxu0
        %v1745 = vadd.f32 %v408, %v1744
        %v1746 = vpop.f32.mrf.mxu0
        %v1747 = vadd.f32 %v412, %v1746
        %v1748 = vpop.f32.mrf.mxu0
        %v1749 = vadd.f32 %v408, %v1748
        %v1750 = vpop.f32.mrf.mxu0
        %v1751 = vadd.f32 %v412, %v1750
        %1752 = vmatprep.mubr.bf16.mxu0 %v672
        %1753 = vmatmul.mubr.bf16.gmra.mxu0 %v671
        %v1754 = vpop.f32.mrf.mxu0
        %v1755 = vadd.f32 %v408, %v1754
        %v1756 = vpop.f32.mrf.mxu0
        %v1757 = vadd.f32 %v412, %v1756
        %v1758 = vpop.f32.mrf.mxu0
        %v1759 = vadd.f32 %v408, %v1758
        %v1760 = vpop.f32.mrf.mxu0
        %v1761 = vadd.f32 %v412, %v1760
        %1762 = vdwg.mxu0
        %v1763 = vpack.c.bf16 %v1096, %v1092
        %v1764 = vpack.c.bf16 %v1098, %v1094
        %v1765 = vpack.c.bf16 %v1449, %v1445
        %v1766 = vpack.c.bf16 %v1451, %v1447
        %v1767 = vpack.c.bf16 %v1106, %v1102
        %v1768 = vpack.c.bf16 %v1108, %v1104
        %v1769 = vpack.c.bf16 %v1459, %v1455
        %v1770 = vpack.c.bf16 %v1461, %v1457
        %v1771 = vpack.c.bf16 %v1116, %v1112
        %v1772 = vpack.c.bf16 %v1118, %v1114
        %v1773 = vpack.c.bf16 %v1469, %v1465
        %v1774 = vpack.c.bf16 %v1471, %v1467
        %v1775 = vpack.c.bf16 %v1126, %v1122
        %v1776 = vpack.c.bf16 %v1128, %v1124
        %v1777 = vpack.c.bf16 %v1479, %v1475
        %v1778 = vpack.c.bf16 %v1481, %v1477
        %v1779 = vpack.c.bf16 %v1136, %v1132
        %v1780 = vpack.c.bf16 %v1138, %v1134
        %v1781 = vpack.c.bf16 %v1489, %v1485
        %v1782 = vpack.c.bf16 %v1491, %v1487
        %v1783 = vpack.c.bf16 %v1146, %v1142
        %v1784 = vpack.c.bf16 %v1148, %v1144
        %v1785 = vpack.c.bf16 %v1499, %v1495
        %v1786 = vpack.c.bf16 %v1501, %v1497
        %v1787 = vpack.c.bf16 %v1156, %v1152
        %v1788 = vpack.c.bf16 %v1158, %v1154
        %v1789 = vpack.c.bf16 %v1509, %v1505
        %v1790 = vpack.c.bf16 %v1511, %v1507
        %v1791 = vpack.c.bf16 %v1166, %v1162
        %v1792 = vpack.c.bf16 %v1168, %v1164
        %v1793 = vpack.c.bf16 %v1519, %v1515
        %v1794 = vpack.c.bf16 %v1521, %v1517
        %v1795 = vpack.c.bf16 %v1176, %v1172
        %v1796 = vpack.c.bf16 %v1178, %v1174
        %v1797 = vpack.c.bf16 %v1529, %v1525
        %v1798 = vpack.c.bf16 %v1531, %v1527
        %v1799 = vpack.c.bf16 %v1186, %v1182
        %v1800 = vpack.c.bf16 %v1188, %v1184
        %v1801 = vpack.c.bf16 %v1539, %v1535
        %v1802 = vpack.c.bf16 %v1541, %v1537
        %v1803 = vpack.c.bf16 %v1196, %v1192
        %v1804 = vpack.c.bf16 %v1198, %v1194
        %v1805 = vpack.c.bf16 %v1549, %v1545
        %v1806 = vpack.c.bf16 %v1551, %v1547
        %v1807 = vpack.c.bf16 %v1206, %v1202
        %v1808 = vpack.c.bf16 %v1208, %v1204
        %v1809 = vpack.c.bf16 %v1559, %v1555
        %v1810 = vpack.c.bf16 %v1561, %v1557
        %v1811 = vpack.c.bf16 %v1216, %v1212
        %v1812 = vpack.c.bf16 %v1218, %v1214
        %v1813 = vpack.c.bf16 %v1569, %v1565
        %v1814 = vpack.c.bf16 %v1571, %v1567
        %v1815 = vpack.c.bf16 %v1226, %v1222
        %v1816 = vpack.c.bf16 %v1228, %v1224
        %v1817 = vpack.c.bf16 %v1579, %v1575
        %v1818 = vpack.c.bf16 %v1581, %v1577
        %v1819 = vpack.c.bf16 %v1236, %v1232
        %v1820 = vpack.c.bf16 %v1238, %v1234
        %v1821 = vpack.c.bf16 %v1589, %v1585
        %v1822 = vpack.c.bf16 %v1591, %v1587
        %v1823 = vpack.c.bf16 %v1246, %v1242
        %v1824 = vpack.c.bf16 %v1248, %v1244
        %v1825 = vpack.c.bf16 %v1599, %v1595
        %v1826 = vpack.c.bf16 %v1601, %v1597
        %v1827 = vpack.c.bf16 %v1256, %v1252
        %v1828 = vpack.c.bf16 %v1258, %v1254
        %v1829 = vpack.c.bf16 %v1609, %v1605
        %v1830 = vpack.c.bf16 %v1611, %v1607
        %v1831 = vpack.c.bf16 %v1266, %v1262
        %v1832 = vpack.c.bf16 %v1268, %v1264
        %v1833 = vpack.c.bf16 %v1619, %v1615
        %v1834 = vpack.c.bf16 %v1621, %v1617
        %v1835 = vpack.c.bf16 %v1276, %v1272
        %v1836 = vpack.c.bf16 %v1278, %v1274
        %v1837 = vpack.c.bf16 %v1629, %v1625
        %v1838 = vpack.c.bf16 %v1631, %v1627
        %v1839 = vpack.c.bf16 %v1286, %v1282
        %v1840 = vpack.c.bf16 %v1288, %v1284
        %v1841 = vpack.c.bf16 %v1639, %v1635
        %v1842 = vpack.c.bf16 %v1641, %v1637
        %v1843 = vpack.c.bf16 %v1296, %v1292
        %v1844 = vpack.c.bf16 %v1298, %v1294
        %v1845 = vpack.c.bf16 %v1649, %v1645
        %v1846 = vpack.c.bf16 %v1651, %v1647
        %v1847 = vpack.c.bf16 %v1306, %v1302
        %v1848 = vpack.c.bf16 %v1308, %v1304
        %v1849 = vpack.c.bf16 %v1659, %v1655
        %v1850 = vpack.c.bf16 %v1661, %v1657
        %v1851 = vpack.c.bf16 %v1316, %v1312
        %v1852 = vpack.c.bf16 %v1318, %v1314
        %v1853 = vpack.c.bf16 %v1669, %v1665
        %v1854 = vpack.c.bf16 %v1671, %v1667
        %v1855 = vpack.c.bf16 %v1326, %v1322
        %v1856 = vpack.c.bf16 %v1328, %v1324
        %v1857 = vpack.c.bf16 %v1679, %v1675
        %v1858 = vpack.c.bf16 %v1681, %v1677
        %v1859 = vpack.c.bf16 %v1336, %v1332
        %v1860 = vpack.c.bf16 %v1338, %v1334
        %v1861 = vpack.c.bf16 %v1689, %v1685
        %v1862 = vpack.c.bf16 %v1691, %v1687
        %v1863 = vpack.c.bf16 %v1346, %v1342
        %v1864 = vpack.c.bf16 %v1348, %v1344
        %v1865 = vpack.c.bf16 %v1699, %v1695
        %v1866 = vpack.c.bf16 %v1701, %v1697
        %v1867 = vpack.c.bf16 %v1356, %v1352
        %v1868 = vpack.c.bf16 %v1358, %v1354
        %v1869 = vpack.c.bf16 %v1709, %v1705
        %v1870 = vpack.c.bf16 %v1711, %v1707
        %v1871 = vpack.c.bf16 %v1366, %v1362
        %v1872 = vpack.c.bf16 %v1368, %v1364
        %v1873 = vpack.c.bf16 %v1719, %v1715
        %v1874 = vpack.c.bf16 %v1721, %v1717
        %v1875 = vpack.c.bf16 %v1376, %v1372
        %v1876 = vpack.c.bf16 %v1378, %v1374
        %v1877 = vpack.c.bf16 %v1729, %v1725
        %v1878 = vpack.c.bf16 %v1731, %v1727
        %v1879 = vpack.c.bf16 %v1386, %v1382
        %v1880 = vpack.c.bf16 %v1388, %v1384
        %v1881 = vpack.c.bf16 %v1739, %v1735
        %v1882 = vpack.c.bf16 %v1741, %v1737
        %v1883 = vpack.c.bf16 %v1396, %v1392
        %v1884 = vpack.c.bf16 %v1398, %v1394
        %v1885 = vpack.c.bf16 %v1749, %v1745
        %v1886 = vpack.c.bf16 %v1751, %v1747
        %v1887 = vpack.c.bf16 %v1406, %v1402
        %v1888 = vpack.c.bf16 %v1408, %v1404
        %v1889 = vpack.c.bf16 %v1759, %v1755
        %v1890 = vpack.c.bf16 %v1761, %v1757
        %v1891 = vtanh.bf16.pop %v1763
        %v1892 = vtanh.bf16.pop %v1764
        %v1893 = vtanh.bf16.pop %v1765
        %v1894 = vtanh.bf16.pop %v1766
        %v1895 = vtanh.bf16.pop %v1767
        %v1896 = vtanh.bf16.pop %v1768
        %v1897 = vtanh.bf16.pop %v1769
        %v1898 = vtanh.bf16.pop %v1770
        %v1899 = vtanh.bf16.pop %v1771
        %v1900 = vtanh.bf16.pop %v1772
        %v1901 = vtanh.bf16.pop %v1773
        %v1902 = vtanh.bf16.pop %v1774
        %v1903 = vtanh.bf16.pop %v1775
        %v1904 = vtanh.bf16.pop %v1776
        %v1905 = vtanh.bf16.pop %v1777
        %v1906 = vtanh.bf16.pop %v1778
        %v1907 = vtanh.bf16.pop %v1779
        %v1908 = vtanh.bf16.pop %v1780
        %v1909 = vtanh.bf16.pop %v1781
        %v1910 = vtanh.bf16.pop %v1782
        %v1911 = vtanh.bf16.pop %v1783
        %v1912 = vtanh.bf16.pop %v1784
        %v1913 = vtanh.bf16.pop %v1785
        %v1914 = vtanh.bf16.pop %v1786
        %v1915 = vtanh.bf16.pop %v1787
        %v1916 = vtanh.bf16.pop %v1788
        %v1917 = vtanh.bf16.pop %v1789
        %v1918 = vtanh.bf16.pop %v1790
        %v1919 = vtanh.bf16.pop %v1791
        %v1920 = vtanh.bf16.pop %v1792
        %v1921 = vtanh.bf16.pop %v1793
        %v1922 = vtanh.bf16.pop %v1794
        %v1923 = vtanh.bf16.pop %v1795
        %v1924 = vtanh.bf16.pop %v1796
        %v1925 = vtanh.bf16.pop %v1797
        %v1926 = vtanh.bf16.pop %v1798
        %v1927 = vtanh.bf16.pop %v1799
        %v1928 = vtanh.bf16.pop %v1800
        %v1929 = vtanh.bf16.pop %v1801
        %v1930 = vtanh.bf16.pop %v1802
        %v1931 = vtanh.bf16.pop %v1803
        %v1932 = vtanh.bf16.pop %v1804
        %v1933 = vtanh.bf16.pop %v1805
        %v1934 = vtanh.bf16.pop %v1806
        %v1935 = vtanh.bf16.pop %v1807
        %v1936 = vtanh.bf16.pop %v1808
        %v1937 = vtanh.bf16.pop %v1809
        %v1938 = vtanh.bf16.pop %v1810
        %v1939 = vtanh.bf16.pop %v1811
        %v1940 = vtanh.bf16.pop %v1812
        %v1941 = vtanh.bf16.pop %v1813
        %v1942 = vtanh.bf16.pop %v1814
        %v1943 = vtanh.bf16.pop %v1815
        %v1944 = vtanh.bf16.pop %v1816
        %v1945 = vtanh.bf16.pop %v1817
        %v1946 = vtanh.bf16.pop %v1818
        %v1947 = vtanh.bf16.pop %v1819
        %v1948 = vtanh.bf16.pop %v1820
        %v1949 = vtanh.bf16.pop %v1821
        %v1950 = vtanh.bf16.pop %v1822
        %v1951 = vtanh.bf16.pop %v1823
        %v1952 = vtanh.bf16.pop %v1824
        %v1953 = vtanh.bf16.pop %v1825
        %v1954 = vtanh.bf16.pop %v1826
        %v1955 = vtanh.bf16.pop %v1827
        %v1956 = vtanh.bf16.pop %v1828
        %v1957 = vtanh.bf16.pop %v1829
        %v1958 = vtanh.bf16.pop %v1830
        %v1959 = vtanh.bf16.pop %v1831
        %v1960 = vtanh.bf16.pop %v1832
        %v1961 = vtanh.bf16.pop %v1833
        %v1962 = vtanh.bf16.pop %v1834
        %v1963 = vtanh.bf16.pop %v1835
        %v1964 = vtanh.bf16.pop %v1836
        %v1965 = vtanh.bf16.pop %v1837
        %v1966 = vtanh.bf16.pop %v1838
        %v1967 = vtanh.bf16.pop %v1839
        %v1968 = vtanh.bf16.pop %v1840
        %v1969 = vtanh.bf16.pop %v1841
        %v1970 = vtanh.bf16.pop %v1842
        %v1971 = vtanh.bf16.pop %v1843
        %v1972 = vtanh.bf16.pop %v1844
        %v1973 = vtanh.bf16.pop %v1845
        %v1974 = vtanh.bf16.pop %v1846
        %v1975 = vtanh.bf16.pop %v1847
        %v1976 = vtanh.bf16.pop %v1848
        %v1977 = vtanh.bf16.pop %v1849
        %v1978 = vtanh.bf16.pop %v1850
        %v1979 = vtanh.bf16.pop %v1851
        %v1980 = vtanh.bf16.pop %v1852
        %v1981 = vtanh.bf16.pop %v1853
        %v1982 = vtanh.bf16.pop %v1854
        %v1983 = vtanh.bf16.pop %v1855
        %v1984 = vtanh.bf16.pop %v1856
        %v1985 = vtanh.bf16.pop %v1857
        %v1986 = vtanh.bf16.pop %v1858
        %v1987 = vtanh.bf16.pop %v1859
        %v1988 = vtanh.bf16.pop %v1860
        %v1989 = vtanh.bf16.pop %v1861
        %v1990 = vtanh.bf16.pop %v1862
        %v1991 = vtanh.bf16.pop %v1863
        %v1992 = vtanh.bf16.pop %v1864
        %v1993 = vtanh.bf16.pop %v1865
        %v1994 = vtanh.bf16.pop %v1866
        %v1995 = vtanh.bf16.pop %v1867
        %v1996 = vtanh.bf16.pop %v1868
        %v1997 = vtanh.bf16.pop %v1869
        %v1998 = vtanh.bf16.pop %v1870
        %v1999 = vtanh.bf16.pop %v1871
        %v2000 = vtanh.bf16.pop %v1872
        %v2001 = vtanh.bf16.pop %v1873
        %v2002 = vtanh.bf16.pop %v1874
        %v2003 = vtanh.bf16.pop %v1875
        %v2004 = vtanh.bf16.pop %v1876
        %v2005 = vtanh.bf16.pop %v1877
        %v2006 = vtanh.bf16.pop %v1878
        %v2007 = vtanh.bf16.pop %v1879
        %v2008 = vtanh.bf16.pop %v1880
        %v2009 = vtanh.bf16.pop %v1881
        %v2010 = vtanh.bf16.pop %v1882
        %v2011 = vtanh.bf16.pop %v1883
        %v2012 = vtanh.bf16.pop %v1884
        %v2013 = vtanh.bf16.pop %v1885
        %v2014 = vtanh.bf16.pop %v1886
        %v2015 = vtanh.bf16.pop %v1887
        %v2016 = vtanh.bf16.pop %v1888
        %v2017 = vtanh.bf16.pop %v1889
        %v2018 = vtanh.bf16.pop %v1890
        %v2019 = vadd.bf16 %v1893, 1065369472
        %v2020 = vadd.bf16 %v1894, 1065369472
        %v2021 = vadd.bf16 %v1897, 1065369472
        %v2022 = vadd.bf16 %v1898, 1065369472
        %v2023 = vadd.bf16 %v1901, 1065369472
        %v2024 = vadd.bf16 %v1902, 1065369472
        %v2025 = vadd.bf16 %v1905, 1065369472
        %v2026 = vadd.bf16 %v1906, 1065369472
        %v2027 = vadd.bf16 %v1909, 1065369472
        %v2028 = vadd.bf16 %v1910, 1065369472
        %v2029 = vadd.bf16 %v1913, 1065369472
        %v2030 = vadd.bf16 %v1914, 1065369472
        %v2031 = vadd.bf16 %v1917, 1065369472
        %v2032 = vadd.bf16 %v1918, 1065369472
        %v2033 = vadd.bf16 %v1921, 1065369472
        %v2034 = vadd.bf16 %v1922, 1065369472
        %v2035 = vadd.bf16 %v1925, 1065369472
        %v2036 = vadd.bf16 %v1926, 1065369472
        %v2037 = vadd.bf16 %v1929, 1065369472
        %v2038 = vadd.bf16 %v1930, 1065369472
        %v2039 = vadd.bf16 %v1933, 1065369472
        %v2040 = vadd.bf16 %v1934, 1065369472
        %v2041 = vadd.bf16 %v1937, 1065369472
        %v2042 = vadd.bf16 %v1938, 1065369472
        %v2043 = vadd.bf16 %v1941, 1065369472
        %v2044 = vadd.bf16 %v1942, 1065369472
        %v2045 = vadd.bf16 %v1945, 1065369472
        %v2046 = vadd.bf16 %v1946, 1065369472
        %v2047 = vadd.bf16 %v1949, 1065369472
        %v2048 = vadd.bf16 %v1950, 1065369472
        %v2049 = vadd.bf16 %v1953, 1065369472
        %v2050 = vadd.bf16 %v1954, 1065369472
        %v2051 = vadd.bf16 %v1957, 1065369472
        %v2052 = vadd.bf16 %v1958, 1065369472
        %v2053 = vadd.bf16 %v1961, 1065369472
        %v2054 = vadd.bf16 %v1962, 1065369472
        %v2055 = vadd.bf16 %v1965, 1065369472
        %v2056 = vadd.bf16 %v1966, 1065369472
        %v2057 = vadd.bf16 %v1969, 1065369472
        %v2058 = vadd.bf16 %v1970, 1065369472
        %v2059 = vadd.bf16 %v1973, 1065369472
        %v2060 = vadd.bf16 %v1974, 1065369472
        %v2061 = vadd.bf16 %v1977, 1065369472
        %v2062 = vadd.bf16 %v1978, 1065369472
        %v2063 = vadd.bf16 %v1981, 1065369472
        %v2064 = vadd.bf16 %v1982, 1065369472
        %v2065 = vadd.bf16 %v1985, 1065369472
        %v2066 = vadd.bf16 %v1986, 1065369472
        %v2067 = vadd.bf16 %v1989, 1065369472
        %v2068 = vadd.bf16 %v1990, 1065369472
        %v2069 = vadd.bf16 %v1993, 1065369472
        %v2070 = vadd.bf16 %v1994, 1065369472
        %v2071 = vadd.bf16 %v1997, 1065369472
        %v2072 = vadd.bf16 %v1998, 1065369472
        %v2073 = vadd.bf16 %v2001, 1065369472
        %v2074 = vadd.bf16 %v2002, 1065369472
        %v2075 = vadd.bf16 %v2005, 1065369472
        %v2076 = vadd.bf16 %v2006, 1065369472
        %v2077 = vadd.bf16 %v2009, 1065369472
        %v2078 = vadd.bf16 %v2010, 1065369472
        %v2079 = vadd.bf16 %v2013, 1065369472
        %v2080 = vadd.bf16 %v2014, 1065369472
        %v2081 = vadd.bf16 %v2017, 1065369472
        %v2082 = vadd.bf16 %v2018, 1065369472
        %v2083 = vmul.bf16 %v2019, 1056980736
        %v2084 = vmul.bf16 %v2020, 1056980736
        %v2085 = vmul.bf16 %v2021, 1056980736
        %v2086 = vmul.bf16 %v2022, 1056980736
        %v2087 = vmul.bf16 %v2023, 1056980736
        %v2088 = vmul.bf16 %v2024, 1056980736
        %v2089 = vmul.bf16 %v2025, 1056980736
        %v2090 = vmul.bf16 %v2026, 1056980736
        %v2091 = vmul.bf16 %v2027, 1056980736
        %v2092 = vmul.bf16 %v2028, 1056980736
        %v2093 = vmul.bf16 %v2029, 1056980736
        %v2094 = vmul.bf16 %v2030, 1056980736
        %v2095 = vmul.bf16 %v2031, 1056980736
        %v2096 = vmul.bf16 %v2032, 1056980736
        %v2097 = vmul.bf16 %v2033, 1056980736
        %v2098 = vmul.bf16 %v2034, 1056980736
        %v2099 = vmul.bf16 %v2035, 1056980736
        %v2100 = vmul.bf16 %v2036, 1056980736
        %v2101 = vmul.bf16 %v2037, 1056980736
        %v2102 = vmul.bf16 %v2038, 1056980736
        %v2103 = vmul.bf16 %v2039, 1056980736
        %v2104 = vmul.bf16 %v2040, 1056980736
        %v2105 = vmul.bf16 %v2041, 1056980736
        %v2106 = vmul.bf16 %v2042, 1056980736
        %v2107 = vmul.bf16 %v2043, 1056980736
        %v2108 = vmul.bf16 %v2044, 1056980736
        %v2109 = vmul.bf16 %v2045, 1056980736
        %v2110 = vmul.bf16 %v2046, 1056980736
        %v2111 = vmul.bf16 %v2047, 1056980736
        %v2112 = vmul.bf16 %v2048, 1056980736
        %v2113 = vmul.bf16 %v2049, 1056980736
        %v2114 = vmul.bf16 %v2050, 1056980736
        %v2115 = vmul.bf16 %v2051, 1056980736
        %v2116 = vmul.bf16 %v2052, 1056980736
        %v2117 = vmul.bf16 %v2053, 1056980736
        %v2118 = vmul.bf16 %v2054, 1056980736
        %v2119 = vmul.bf16 %v2055, 1056980736
        %v2120 = vmul.bf16 %v2056, 1056980736
        %v2121 = vmul.bf16 %v2057, 1056980736
        %v2122 = vmul.bf16 %v2058, 1056980736
        %v2123 = vmul.bf16 %v2059, 1056980736
        %v2124 = vmul.bf16 %v2060, 1056980736
        %v2125 = vmul.bf16 %v2061, 1056980736
        %v2126 = vmul.bf16 %v2062, 1056980736
        %v2127 = vmul.bf16 %v2063, 1056980736
        %v2128 = vmul.bf16 %v2064, 1056980736
        %v2129 = vmul.bf16 %v2065, 1056980736
        %v2130 = vmul.bf16 %v2066, 1056980736
        %v2131 = vmul.bf16 %v2067, 1056980736
        %v2132 = vmul.bf16 %v2068, 1056980736
        %v2133 = vmul.bf16 %v2069, 1056980736
        %v2134 = vmul.bf16 %v2070, 1056980736
        %v2135 = vmul.bf16 %v2071, 1056980736
        %v2136 = vmul.bf16 %v2072, 1056980736
        %v2137 = vmul.bf16 %v2073, 1056980736
        %v2138 = vmul.bf16 %v2074, 1056980736
        %v2139 = vmul.bf16 %v2075, 1056980736
        %v2140 = vmul.bf16 %v2076, 1056980736
        %v2141 = vmul.bf16 %v2077, 1056980736
        %v2142 = vmul.bf16 %v2078, 1056980736
        %v2143 = vmul.bf16 %v2079, 1056980736
        %v2144 = vmul.bf16 %v2080, 1056980736
        %v2145 = vmul.bf16 %v2081, 1056980736
        %v2146 = vmul.bf16 %v2082, 1056980736
        %v2147 = vmul.bf16 %v1891, %v2083
        %v2148 = vmul.bf16 %v1892, %v2084
        %v2149 = vmul.bf16 %v1895, %v2085
        %v2150 = vmul.bf16 %v1896, %v2086
        %v2151 = vmul.bf16 %v1899, %v2087
        %v2152 = vmul.bf16 %v1900, %v2088
        %v2153 = vmul.bf16 %v1903, %v2089
        %v2154 = vmul.bf16 %v1904, %v2090
        %v2155 = vmul.bf16 %v1907, %v2091
        %v2156 = vmul.bf16 %v1908, %v2092
        %v2157 = vmul.bf16 %v1911, %v2093
        %v2158 = vmul.bf16 %v1912, %v2094
        %v2159 = vmul.bf16 %v1915, %v2095
        %v2160 = vmul.bf16 %v1916, %v2096
        %v2161 = vmul.bf16 %v1919, %v2097
        %v2162 = vmul.bf16 %v1920, %v2098
        %v2163 = vmul.bf16 %v1923, %v2099
        %v2164 = vmul.bf16 %v1924, %v2100
        %v2165 = vmul.bf16 %v1927, %v2101
        %v2166 = vmul.bf16 %v1928, %v2102
        %v2167 = vmul.bf16 %v1931, %v2103
        %v2168 = vmul.bf16 %v1932, %v2104
        %v2169 = vmul.bf16 %v1935, %v2105
        %v2170 = vmul.bf16 %v1936, %v2106
        %v2171 = vmul.bf16 %v1939, %v2107
        %v2172 = vmul.bf16 %v1940, %v2108
        %v2173 = vmul.bf16 %v1943, %v2109
        %v2174 = vmul.bf16 %v1944, %v2110
        %v2175 = vmul.bf16 %v1947, %v2111
        %v2176 = vmul.bf16 %v1948, %v2112
        %v2177 = vmul.bf16 %v1951, %v2113
        %v2178 = vmul.bf16 %v1952, %v2114
        %v2179 = vmul.bf16 %v1955, %v2115
        %v2180 = vmul.bf16 %v1956, %v2116
        %v2181 = vmul.bf16 %v1959, %v2117
        %v2182 = vmul.bf16 %v1960, %v2118
        %v2183 = vmul.bf16 %v1963, %v2119
        %v2184 = vmul.bf16 %v1964, %v2120
        %v2185 = vmul.bf16 %v1967, %v2121
        %v2186 = vmul.bf16 %v1968, %v2122
        %v2187 = vmul.bf16 %v1971, %v2123
        %v2188 = vmul.bf16 %v1972, %v2124
        %v2189 = vmul.bf16 %v1975, %v2125
        %v2190 = vmul.bf16 %v1976, %v2126
        %v2191 = vmul.bf16 %v1979, %v2127
        %v2192 = vmul.bf16 %v1980, %v2128
        %v2193 = vmul.bf16 %v1983, %v2129
        %v2194 = vmul.bf16 %v1984, %v2130
        %v2195 = vmul.bf16 %v1987, %v2131
        %v2196 = vmul.bf16 %v1988, %v2132
        %v2197 = vmul.bf16 %v1991, %v2133
        %v2198 = vmul.bf16 %v1992, %v2134
        %v2199 = vmul.bf16 %v1995, %v2135
        %v2200 = vmul.bf16 %v1996, %v2136
        %v2201 = vmul.bf16 %v1999, %v2137
        %v2202 = vmul.bf16 %v2000, %v2138
        %v2203 = vmul.bf16 %v2003, %v2139
        %v2204 = vmul.bf16 %v2004, %v2140
        %v2205 = vmul.bf16 %v2007, %v2141
        %v2206 = vmul.bf16 %v2008, %v2142
        %v2207 = vmul.bf16 %v2011, %v2143
        %v2208 = vmul.bf16 %v2012, %v2144
        %v2209 = vmul.bf16 %v2015, %v2145
        %v2210 = vmul.bf16 %v2016, %v2146
        %v2211 = vld [vmem:[%s3] sm:$0x3]
        %v2214 = vunpack.c.l.s4 1966171168
        %v2215 = vunpack.c.0.s8 %v2214
        %v2216 = vlaneseq
        %v2217 = vshrl.u32 %v2216, 7
        %v2218 = vsub.s32 %v2215, %v2217
        %v2219 = vrot.slane %v2211, %v2218
        %v2220 = vcombine.high %v2219, %v2219
        %v2222 = vunpack.c.l.s4 1966171168
        %v2223 = vunpack.c.0.s8 %v2222
        %v2224 = vlaneseq
        %v2225 = vshrl.u32 %v2224, 7
        %v2226 = vsub.s32 %v2223, %v2225
        %v2227 = vrot.slane %v2219, %v2226
        %v2229 = vunpack.c.l.s4 1966171168
        %v2230 = vunpack.c.0.s8 %v2229
        %v2231 = vlaneseq
        %v2232 = vshrl.u32 %v2231, 7
        %v2233 = vsub.s32 %v2230, %v2232
        %v2234 = vrot.slane %v2220, %v2233
        %v2236 = vpack.i.b16 %v2227, %v2227
        %v2238 = vlaneseq
        %v2239 = vshrl.u32 %v2238, 7
        %v2240 = vsub.s32 0, %v2239
        %v2241 = vrot.slane %v2236, %v2240
        %v2243 = vpack.i.b16 %v2234, %v2234
        %v2245 = vlaneseq
        %v2246 = vshrl.u32 %v2245, 7
        %v2247 = vsub.s32 0, %v2246
        %v2248 = vrot.slane %v2243, %v2247
        %v2249 = vmul.bf16 %v2147, %v2241
        %v2250 = vmul.bf16 %v2148, %v2248
        %v2251 = vmul.bf16 %v2149, %v2241
        %v2252 = vmul.bf16 %v2150, %v2248
        %v2253 = vmul.bf16 %v2151, %v2241
        %v2254 = vmul.bf16 %v2152, %v2248
        %v2255 = vmul.bf16 %v2153, %v2241
        %v2256 = vmul.bf16 %v2154, %v2248
        %v2257 = vmul.bf16 %v2155, %v2241
        %v2258 = vmul.bf16 %v2156, %v2248
        %v2259 = vmul.bf16 %v2157, %v2241
        %v2260 = vmul.bf16 %v2158, %v2248
        %v2261 = vmul.bf16 %v2159, %v2241
        %v2262 = vmul.bf16 %v2160, %v2248
        %v2263 = vmul.bf16 %v2161, %v2241
        %v2264 = vmul.bf16 %v2162, %v2248
        %v2265 = vmul.bf16 %v2163, %v2241
        %v2266 = vmul.bf16 %v2164, %v2248
        %v2267 = vmul.bf16 %v2165, %v2241
        %v2268 = vmul.bf16 %v2166, %v2248
        %v2269 = vmul.bf16 %v2167, %v2241
        %v2270 = vmul.bf16 %v2168, %v2248
        %v2271 = vmul.bf16 %v2169, %v2241
        %v2272 = vmul.bf16 %v2170, %v2248
        %v2273 = vmul.bf16 %v2171, %v2241
        %v2274 = vmul.bf16 %v2172, %v2248
        %v2275 = vmul.bf16 %v2173, %v2241
        %v2276 = vmul.bf16 %v2174, %v2248
        %v2277 = vmul.bf16 %v2175, %v2241
        %v2278 = vmul.bf16 %v2176, %v2248
        %v2279 = vmul.bf16 %v2177, %v2241
        %v2280 = vmul.bf16 %v2178, %v2248
        %v2281 = vmul.bf16 %v2179, %v2241
        %v2282 = vmul.bf16 %v2180, %v2248
        %v2283 = vmul.bf16 %v2181, %v2241
        %v2284 = vmul.bf16 %v2182, %v2248
        %v2285 = vmul.bf16 %v2183, %v2241
        %v2286 = vmul.bf16 %v2184, %v2248
        %v2287 = vmul.bf16 %v2185, %v2241
        %v2288 = vmul.bf16 %v2186, %v2248
        %v2289 = vmul.bf16 %v2187, %v2241
        %v2290 = vmul.bf16 %v2188, %v2248
        %v2291 = vmul.bf16 %v2189, %v2241
        %v2292 = vmul.bf16 %v2190, %v2248
        %v2293 = vmul.bf16 %v2191, %v2241
        %v2294 = vmul.bf16 %v2192, %v2248
        %v2295 = vmul.bf16 %v2193, %v2241
        %v2296 = vmul.bf16 %v2194, %v2248
        %v2297 = vmul.bf16 %v2195, %v2241
        %v2298 = vmul.bf16 %v2196, %v2248
        %v2299 = vmul.bf16 %v2197, %v2241
        %v2300 = vmul.bf16 %v2198, %v2248
        %v2301 = vmul.bf16 %v2199, %v2241
        %v2302 = vmul.bf16 %v2200, %v2248
        %v2303 = vmul.bf16 %v2201, %v2241
        %v2304 = vmul.bf16 %v2202, %v2248
        %v2305 = vmul.bf16 %v2203, %v2241
        %v2306 = vmul.bf16 %v2204, %v2248
        %v2307 = vmul.bf16 %v2205, %v2241
        %v2308 = vmul.bf16 %v2206, %v2248
        %v2309 = vmul.bf16 %v2207, %v2241
        %v2310 = vmul.bf16 %v2208, %v2248
        %v2311 = vmul.bf16 %v2209, %v2241
        %v2312 = vmul.bf16 %v2210, %v2248
        %v2313 = vunpack.c.l.bf16 %v2249
        %v2314 = vunpack.c.l.bf16 %v2250
        %v2315 = vunpack.c.h.bf16 %v2249
        %v2316 = vunpack.c.h.bf16 %v2250
        %v2317 = vunpack.c.l.bf16 %v2251
        %v2318 = vunpack.c.l.bf16 %v2252
        %v2319 = vunpack.c.h.bf16 %v2251
        %v2320 = vunpack.c.h.bf16 %v2252
        %v2321 = vunpack.c.l.bf16 %v2253
        %v2322 = vunpack.c.l.bf16 %v2254
        %v2323 = vunpack.c.h.bf16 %v2253
        %v2324 = vunpack.c.h.bf16 %v2254
        %v2325 = vunpack.c.l.bf16 %v2255
        %v2326 = vunpack.c.l.bf16 %v2256
        %v2327 = vunpack.c.h.bf16 %v2255
        %v2328 = vunpack.c.h.bf16 %v2256
        %v2329 = vunpack.c.l.bf16 %v2257
        %v2330 = vunpack.c.l.bf16 %v2258
        %v2331 = vunpack.c.h.bf16 %v2257
        %v2332 = vunpack.c.h.bf16 %v2258
        %v2333 = vunpack.c.l.bf16 %v2259
        %v2334 = vunpack.c.l.bf16 %v2260
        %v2335 = vunpack.c.h.bf16 %v2259
        %v2336 = vunpack.c.h.bf16 %v2260
        %v2337 = vunpack.c.l.bf16 %v2261
        %v2338 = vunpack.c.l.bf16 %v2262
        %v2339 = vunpack.c.h.bf16 %v2261
        %v2340 = vunpack.c.h.bf16 %v2262
        %v2341 = vunpack.c.l.bf16 %v2263
        %v2342 = vunpack.c.l.bf16 %v2264
        %v2343 = vunpack.c.h.bf16 %v2263
        %v2344 = vunpack.c.h.bf16 %v2264
        %v2345 = vunpack.c.l.bf16 %v2265
        %v2346 = vunpack.c.l.bf16 %v2266
        %v2347 = vunpack.c.h.bf16 %v2265
        %v2348 = vunpack.c.h.bf16 %v2266
        %v2349 = vunpack.c.l.bf16 %v2267
        %v2350 = vunpack.c.l.bf16 %v2268
        %v2351 = vunpack.c.h.bf16 %v2267
        %v2352 = vunpack.c.h.bf16 %v2268
        %v2353 = vunpack.c.l.bf16 %v2269
        %v2354 = vunpack.c.l.bf16 %v2270
        %v2355 = vunpack.c.h.bf16 %v2269
        %v2356 = vunpack.c.h.bf16 %v2270
        %v2357 = vunpack.c.l.bf16 %v2271
        %v2358 = vunpack.c.l.bf16 %v2272
        %v2359 = vunpack.c.h.bf16 %v2271
        %v2360 = vunpack.c.h.bf16 %v2272
        %v2361 = vunpack.c.l.bf16 %v2273
        %v2362 = vunpack.c.l.bf16 %v2274
        %v2363 = vunpack.c.h.bf16 %v2273
        %v2364 = vunpack.c.h.bf16 %v2274
        %v2365 = vunpack.c.l.bf16 %v2275
        %v2366 = vunpack.c.l.bf16 %v2276
        %v2367 = vunpack.c.h.bf16 %v2275
        %v2368 = vunpack.c.h.bf16 %v2276
        %v2369 = vunpack.c.l.bf16 %v2277
        %v2370 = vunpack.c.l.bf16 %v2278
        %v2371 = vunpack.c.h.bf16 %v2277
        %v2372 = vunpack.c.h.bf16 %v2278
        %v2373 = vunpack.c.l.bf16 %v2279
        %v2374 = vunpack.c.l.bf16 %v2280
        %v2375 = vunpack.c.h.bf16 %v2279
        %v2376 = vunpack.c.h.bf16 %v2280
        %v2377 = vunpack.c.l.bf16 %v2281
        %v2378 = vunpack.c.l.bf16 %v2282
        %v2379 = vunpack.c.h.bf16 %v2281
        %v2380 = vunpack.c.h.bf16 %v2282
        %v2381 = vunpack.c.l.bf16 %v2283
        %v2382 = vunpack.c.l.bf16 %v2284
        %v2383 = vunpack.c.h.bf16 %v2283
        %v2384 = vunpack.c.h.bf16 %v2284
        %v2385 = vunpack.c.l.bf16 %v2285
        %v2386 = vunpack.c.l.bf16 %v2286
        %v2387 = vunpack.c.h.bf16 %v2285
        %v2388 = vunpack.c.h.bf16 %v2286
        %v2389 = vunpack.c.l.bf16 %v2287
        %v2390 = vunpack.c.l.bf16 %v2288
        %v2391 = vunpack.c.h.bf16 %v2287
        %v2392 = vunpack.c.h.bf16 %v2288
        %v2393 = vunpack.c.l.bf16 %v2289
        %v2394 = vunpack.c.l.bf16 %v2290
        %v2395 = vunpack.c.h.bf16 %v2289
        %v2396 = vunpack.c.h.bf16 %v2290
        %v2397 = vunpack.c.l.bf16 %v2291
        %v2398 = vunpack.c.l.bf16 %v2292
        %v2399 = vunpack.c.h.bf16 %v2291
        %v2400 = vunpack.c.h.bf16 %v2292
        %v2401 = vunpack.c.l.bf16 %v2293
        %v2402 = vunpack.c.l.bf16 %v2294
        %v2403 = vunpack.c.h.bf16 %v2293
        %v2404 = vunpack.c.h.bf16 %v2294
        %v2405 = vunpack.c.l.bf16 %v2295
        %v2406 = vunpack.c.l.bf16 %v2296
        %v2407 = vunpack.c.h.bf16 %v2295
        %v2408 = vunpack.c.h.bf16 %v2296
        %v2409 = vunpack.c.l.bf16 %v2297
        %v2410 = vunpack.c.l.bf16 %v2298
        %v2411 = vunpack.c.h.bf16 %v2297
        %v2412 = vunpack.c.h.bf16 %v2298
        %v2413 = vunpack.c.l.bf16 %v2299
        %v2414 = vunpack.c.l.bf16 %v2300
        %v2415 = vunpack.c.h.bf16 %v2299
        %v2416 = vunpack.c.h.bf16 %v2300
        %v2417 = vunpack.c.l.bf16 %v2301
        %v2418 = vunpack.c.l.bf16 %v2302
        %v2419 = vunpack.c.h.bf16 %v2301
        %v2420 = vunpack.c.h.bf16 %v2302
        %v2421 = vunpack.c.l.bf16 %v2303
        %v2422 = vunpack.c.l.bf16 %v2304
        %v2423 = vunpack.c.h.bf16 %v2303
        %v2424 = vunpack.c.h.bf16 %v2304
        %v2425 = vunpack.c.l.bf16 %v2305
        %v2426 = vunpack.c.l.bf16 %v2306
        %v2427 = vunpack.c.h.bf16 %v2305
        %v2428 = vunpack.c.h.bf16 %v2306
        %v2429 = vunpack.c.l.bf16 %v2307
        %v2430 = vunpack.c.l.bf16 %v2308
        %v2431 = vunpack.c.h.bf16 %v2307
        %v2432 = vunpack.c.h.bf16 %v2308
        %v2433 = vunpack.c.l.bf16 %v2309
        %v2434 = vunpack.c.l.bf16 %v2310
        %v2435 = vunpack.c.h.bf16 %v2309
        %v2436 = vunpack.c.h.bf16 %v2310
        %v2437 = vunpack.c.l.bf16 %v2311
        %v2438 = vunpack.c.l.bf16 %v2312
        %v2439 = vunpack.c.h.bf16 %v2311
        %v2440 = vunpack.c.h.bf16 %v2312
        %v2441 = vadd.f32 %v2313, %v2314
        %2442 = vadd.xlane.f32.xlu0 %v2441
        %v2443 = vpop.xlane.xlu0 %2442
        %v2444 = vadd.f32 %v2315, %v2316
        %2445 = vadd.xlane.f32.xlu0 %v2444
        %v2446 = vpop.xlane.xlu0 %2445
        %v2447 = vadd.f32 %v2317, %v2318
        %2448 = vadd.xlane.f32.xlu0 %v2447
        %v2449 = vpop.xlane.xlu0 %2448
        %v2450 = vadd.f32 %v2319, %v2320
        %2451 = vadd.xlane.f32.xlu0 %v2450
        %v2452 = vpop.xlane.xlu0 %2451
        %v2453 = vadd.f32 %v2321, %v2322
        %2454 = vadd.xlane.f32.xlu0 %v2453
        %v2455 = vpop.xlane.xlu0 %2454
        %v2456 = vadd.f32 %v2323, %v2324
        %2457 = vadd.xlane.f32.xlu0 %v2456
        %v2458 = vpop.xlane.xlu0 %2457
        %v2459 = vadd.f32 %v2325, %v2326
        %2460 = vadd.xlane.f32.xlu0 %v2459
        %v2461 = vpop.xlane.xlu0 %2460
        %v2462 = vadd.f32 %v2327, %v2328
        %2463 = vadd.xlane.f32.xlu0 %v2462
        %v2464 = vpop.xlane.xlu0 %2463
        %v2465 = vadd.f32 %v2329, %v2330
        %2466 = vadd.xlane.f32.xlu0 %v2465
        %v2467 = vpop.xlane.xlu0 %2466
        %v2468 = vadd.f32 %v2331, %v2332
        %2469 = vadd.xlane.f32.xlu0 %v2468
        %v2470 = vpop.xlane.xlu0 %2469
        %v2471 = vadd.f32 %v2333, %v2334
        %2472 = vadd.xlane.f32.xlu0 %v2471
        %v2473 = vpop.xlane.xlu0 %2472
        %v2474 = vadd.f32 %v2335, %v2336
        %2475 = vadd.xlane.f32.xlu0 %v2474
        %v2476 = vpop.xlane.xlu0 %2475
        %v2477 = vadd.f32 %v2337, %v2338
        %2478 = vadd.xlane.f32.xlu0 %v2477
        %v2479 = vpop.xlane.xlu0 %2478
        %v2480 = vadd.f32 %v2339, %v2340
        %2481 = vadd.xlane.f32.xlu0 %v2480
        %v2482 = vpop.xlane.xlu0 %2481
        %v2483 = vadd.f32 %v2341, %v2342
        %2484 = vadd.xlane.f32.xlu0 %v2483
        %v2485 = vpop.xlane.xlu0 %2484
        %v2486 = vadd.f32 %v2343, %v2344
        %2487 = vadd.xlane.f32.xlu0 %v2486
        %v2488 = vpop.xlane.xlu0 %2487
        %v2489 = vadd.f32 %v2345, %v2346
        %2490 = vadd.xlane.f32.xlu0 %v2489
        %v2491 = vpop.xlane.xlu0 %2490
        %v2492 = vadd.f32 %v2347, %v2348
        %2493 = vadd.xlane.f32.xlu0 %v2492
        %v2494 = vpop.xlane.xlu0 %2493
        %v2495 = vadd.f32 %v2349, %v2350
        %2496 = vadd.xlane.f32.xlu0 %v2495
        %v2497 = vpop.xlane.xlu0 %2496
        %v2498 = vadd.f32 %v2351, %v2352
        %2499 = vadd.xlane.f32.xlu0 %v2498
        %v2500 = vpop.xlane.xlu0 %2499
        %v2501 = vadd.f32 %v2353, %v2354
        %2502 = vadd.xlane.f32.xlu0 %v2501
        %v2503 = vpop.xlane.xlu0 %2502
        %v2504 = vadd.f32 %v2355, %v2356
        %2505 = vadd.xlane.f32.xlu0 %v2504
        %v2506 = vpop.xlane.xlu0 %2505
        %v2507 = vadd.f32 %v2357, %v2358
        %2508 = vadd.xlane.f32.xlu0 %v2507
        %v2509 = vpop.xlane.xlu0 %2508
        %v2510 = vadd.f32 %v2359, %v2360
        %2511 = vadd.xlane.f32.xlu0 %v2510
        %v2512 = vpop.xlane.xlu0 %2511
        %v2513 = vadd.f32 %v2361, %v2362
        %2514 = vadd.xlane.f32.xlu0 %v2513
        %v2515 = vpop.xlane.xlu0 %2514
        %v2516 = vadd.f32 %v2363, %v2364
        %2517 = vadd.xlane.f32.xlu0 %v2516
        %v2518 = vpop.xlane.xlu0 %2517
        %v2519 = vadd.f32 %v2365, %v2366
        %2520 = vadd.xlane.f32.xlu0 %v2519
        %v2521 = vpop.xlane.xlu0 %2520
        %v2522 = vadd.f32 %v2367, %v2368
        %2523 = vadd.xlane.f32.xlu0 %v2522
        %v2524 = vpop.xlane.xlu0 %2523
        %v2525 = vadd.f32 %v2369, %v2370
        %2526 = vadd.xlane.f32.xlu0 %v2525
        %v2527 = vpop.xlane.xlu0 %2526
        %v2528 = vadd.f32 %v2371, %v2372
        %2529 = vadd.xlane.f32.xlu0 %v2528
        %v2530 = vpop.xlane.xlu0 %2529
        %v2531 = vadd.f32 %v2373, %v2374
        %2532 = vadd.xlane.f32.xlu0 %v2531
        %v2533 = vpop.xlane.xlu0 %2532
        %v2534 = vadd.f32 %v2375, %v2376
        %2535 = vadd.xlane.f32.xlu0 %v2534
        %v2536 = vpop.xlane.xlu0 %2535
        %v2537 = vadd.f32 %v2377, %v2378
        %2538 = vadd.xlane.f32.xlu0 %v2537
        %v2539 = vpop.xlane.xlu0 %2538
        %v2540 = vadd.f32 %v2379, %v2380
        %2541 = vadd.xlane.f32.xlu0 %v2540
        %v2542 = vpop.xlane.xlu0 %2541
        %v2543 = vadd.f32 %v2381, %v2382
        %2544 = vadd.xlane.f32.xlu0 %v2543
        %v2545 = vpop.xlane.xlu0 %2544
        %v2546 = vadd.f32 %v2383, %v2384
        %2547 = vadd.xlane.f32.xlu0 %v2546
        %v2548 = vpop.xlane.xlu0 %2547
        %v2549 = vadd.f32 %v2385, %v2386
        %2550 = vadd.xlane.f32.xlu0 %v2549
        %v2551 = vpop.xlane.xlu0 %2550
        %v2552 = vadd.f32 %v2387, %v2388
        %2553 = vadd.xlane.f32.xlu0 %v2552
        %v2554 = vpop.xlane.xlu0 %2553
        %v2555 = vadd.f32 %v2389, %v2390
        %2556 = vadd.xlane.f32.xlu0 %v2555
        %v2557 = vpop.xlane.xlu0 %2556
        %v2558 = vadd.f32 %v2391, %v2392
        %2559 = vadd.xlane.f32.xlu0 %v2558
        %v2560 = vpop.xlane.xlu0 %2559
        %v2561 = vadd.f32 %v2393, %v2394
        %2562 = vadd.xlane.f32.xlu0 %v2561
        %v2563 = vpop.xlane.xlu0 %2562
        %v2564 = vadd.f32 %v2395, %v2396
        %2565 = vadd.xlane.f32.xlu0 %v2564
        %v2566 = vpop.xlane.xlu0 %2565
        %v2567 = vadd.f32 %v2397, %v2398
        %2568 = vadd.xlane.f32.xlu0 %v2567
        %v2569 = vpop.xlane.xlu0 %2568
        %v2570 = vadd.f32 %v2399, %v2400
        %2571 = vadd.xlane.f32.xlu0 %v2570
        %v2572 = vpop.xlane.xlu0 %2571
        %v2573 = vadd.f32 %v2401, %v2402
        %2574 = vadd.xlane.f32.xlu0 %v2573
        %v2575 = vpop.xlane.xlu0 %2574
        %v2576 = vadd.f32 %v2403, %v2404
        %2577 = vadd.xlane.f32.xlu0 %v2576
        %v2578 = vpop.xlane.xlu0 %2577
        %v2579 = vadd.f32 %v2405, %v2406
        %2580 = vadd.xlane.f32.xlu0 %v2579
        %v2581 = vpop.xlane.xlu0 %2580
        %v2582 = vadd.f32 %v2407, %v2408
        %2583 = vadd.xlane.f32.xlu0 %v2582
        %v2584 = vpop.xlane.xlu0 %2583
        %v2585 = vadd.f32 %v2409, %v2410
        %2586 = vadd.xlane.f32.xlu0 %v2585
        %v2587 = vpop.xlane.xlu0 %2586
        %v2588 = vadd.f32 %v2411, %v2412
        %2589 = vadd.xlane.f32.xlu0 %v2588
        %v2590 = vpop.xlane.xlu0 %2589
        %v2591 = vadd.f32 %v2413, %v2414
        %2592 = vadd.xlane.f32.xlu0 %v2591
        %v2593 = vpop.xlane.xlu0 %2592
        %v2594 = vadd.f32 %v2415, %v2416
        %2595 = vadd.xlane.f32.xlu0 %v2594
        %v2596 = vpop.xlane.xlu0 %2595
        %v2597 = vadd.f32 %v2417, %v2418
        %2598 = vadd.xlane.f32.xlu0 %v2597
        %v2599 = vpop.xlane.xlu0 %2598
        %v2600 = vadd.f32 %v2419, %v2420
        %2601 = vadd.xlane.f32.xlu0 %v2600
        %v2602 = vpop.xlane.xlu0 %2601
        %v2603 = vadd.f32 %v2421, %v2422
        %2604 = vadd.xlane.f32.xlu0 %v2603
        %v2605 = vpop.xlane.xlu0 %2604
        %v2606 = vadd.f32 %v2423, %v2424
        %2607 = vadd.xlane.f32.xlu0 %v2606
        %v2608 = vpop.xlane.xlu0 %2607
        %v2609 = vadd.f32 %v2425, %v2426
        %2610 = vadd.xlane.f32.xlu0 %v2609
        %v2611 = vpop.xlane.xlu0 %2610
        %v2612 = vadd.f32 %v2427, %v2428
        %2613 = vadd.xlane.f32.xlu0 %v2612
        %v2614 = vpop.xlane.xlu0 %2613
        %v2615 = vadd.f32 %v2429, %v2430
        %2616 = vadd.xlane.f32.xlu0 %v2615
        %v2617 = vpop.xlane.xlu0 %2616
        %v2618 = vadd.f32 %v2431, %v2432
        %2619 = vadd.xlane.f32.xlu0 %v2618
        %v2620 = vpop.xlane.xlu0 %2619
        %v2621 = vadd.f32 %v2433, %v2434
        %2622 = vadd.xlane.f32.xlu0 %v2621
        %v2623 = vpop.xlane.xlu0 %2622
        %v2624 = vadd.f32 %v2435, %v2436
        %2625 = vadd.xlane.f32.xlu0 %v2624
        %v2626 = vpop.xlane.xlu0 %2625
        %v2627 = vadd.f32 %v2437, %v2438
        %2628 = vadd.xlane.f32.xlu0 %v2627
        %v2629 = vpop.xlane.xlu0 %2628
        %v2630 = vadd.f32 %v2439, %v2440
        %2631 = vadd.xlane.f32.xlu0 %v2630
        %v2632 = vpop.xlane.xlu0 %2631
        %v2633 = vld [vmem:[#allocation2] sm:$0x1]
        %s2634 = vtos %v2633
        %v2635 = vstv %s2634
        %v2636 = vadd.f32 %v2443, %v2635
        %v2637 = vadd.f32 %v2446, %v2635
        %v2638 = vadd.f32 %v2449, %v2635
        %v2639 = vadd.f32 %v2452, %v2635
        %v2640 = vadd.f32 %v2455, %v2635
        %v2641 = vadd.f32 %v2458, %v2635
        %v2642 = vadd.f32 %v2461, %v2635
        %v2643 = vadd.f32 %v2464, %v2635
        %v2644 = vadd.f32 %v2467, %v2635
        %v2645 = vadd.f32 %v2470, %v2635
        %v2646 = vadd.f32 %v2473, %v2635
        %v2647 = vadd.f32 %v2476, %v2635
        %v2648 = vadd.f32 %v2479, %v2635
        %v2649 = vadd.f32 %v2482, %v2635
        %v2650 = vadd.f32 %v2485, %v2635
        %v2651 = vadd.f32 %v2488, %v2635
        %v2652 = vadd.f32 %v2491, %v2635
        %v2653 = vadd.f32 %v2494, %v2635
        %v2654 = vadd.f32 %v2497, %v2635
        %v2655 = vadd.f32 %v2500, %v2635
        %v2656 = vadd.f32 %v2503, %v2635
        %v2657 = vadd.f32 %v2506, %v2635
        %v2658 = vadd.f32 %v2509, %v2635
        %v2659 = vadd.f32 %v2512, %v2635
        %v2660 = vadd.f32 %v2515, %v2635
        %v2661 = vadd.f32 %v2518, %v2635
        %v2662 = vadd.f32 %v2521, %v2635
        %v2663 = vadd.f32 %v2524, %v2635
        %v2664 = vadd.f32 %v2527, %v2635
        %v2665 = vadd.f32 %v2530, %v2635
        %v2666 = vadd.f32 %v2533, %v2635
        %v2667 = vadd.f32 %v2536, %v2635
        %v2668 = vadd.f32 %v2539, %v2635
        %v2669 = vadd.f32 %v2542, %v2635
        %v2670 = vadd.f32 %v2545, %v2635
        %v2671 = vadd.f32 %v2548, %v2635
        %v2672 = vadd.f32 %v2551, %v2635
        %v2673 = vadd.f32 %v2554, %v2635
        %v2674 = vadd.f32 %v2557, %v2635
        %v2675 = vadd.f32 %v2560, %v2635
        %v2676 = vadd.f32 %v2563, %v2635
        %v2677 = vadd.f32 %v2566, %v2635
        %v2678 = vadd.f32 %v2569, %v2635
        %v2679 = vadd.f32 %v2572, %v2635
        %v2680 = vadd.f32 %v2575, %v2635
        %v2681 = vadd.f32 %v2578, %v2635
        %v2682 = vadd.f32 %v2581, %v2635
        %v2683 = vadd.f32 %v2584, %v2635
        %v2684 = vadd.f32 %v2587, %v2635
        %v2685 = vadd.f32 %v2590, %v2635
        %v2686 = vadd.f32 %v2593, %v2635
        %v2687 = vadd.f32 %v2596, %v2635
        %v2688 = vadd.f32 %v2599, %v2635
        %v2689 = vadd.f32 %v2602, %v2635
        %v2690 = vadd.f32 %v2605, %v2635
        %v2691 = vadd.f32 %v2608, %v2635
        %v2692 = vadd.f32 %v2611, %v2635
        %v2693 = vadd.f32 %v2614, %v2635
        %v2694 = vadd.f32 %v2617, %v2635
        %v2695 = vadd.f32 %v2620, %v2635
        %v2696 = vadd.f32 %v2623, %v2635
        %v2697 = vadd.f32 %v2626, %v2635
        %v2698 = vadd.f32 %v2629, %v2635
        %v2699 = vadd.f32 %v2632, %v2635
        %vm2700 = vcmask 7168
        %2701 = vst.msk [vmem:[%s263] sm:$0xff] %vm2700, %v2636
        %2702 = vst.msk [vmem:[%s263 + $0x8] sm:$0xff] %vm2700, %v2637
        %2703 = vst.msk [vmem:[%s263 + $0x10] sm:$0xff] %vm2700, %v2638
        %2704 = vst.msk [vmem:[%s263 + $0x18] sm:$0xff] %vm2700, %v2639
        %2705 = vst.msk [vmem:[%s263 + $0x20] sm:$0xff] %vm2700, %v2640
        %2706 = vst.msk [vmem:[%s263 + $0x28] sm:$0xff] %vm2700, %v2641
        %2707 = vst.msk [vmem:[%s263 + $0x30] sm:$0xff] %vm2700, %v2642
        %2708 = vst.msk [vmem:[%s263 + $0x38] sm:$0xff] %vm2700, %v2643
        %2709 = vst.msk [vmem:[%s263 + $0x40] sm:$0xff] %vm2700, %v2644
        %2710 = vst.msk [vmem:[%s263 + $0x48] sm:$0xff] %vm2700, %v2645
        %2711 = vst.msk [vmem:[%s263 + $0x50] sm:$0xff] %vm2700, %v2646
        %2712 = vst.msk [vmem:[%s263 + $0x58] sm:$0xff] %vm2700, %v2647
        %2713 = vst.msk [vmem:[%s263 + $0x60] sm:$0xff] %vm2700, %v2648
        %2714 = vst.msk [vmem:[%s263 + $0x68] sm:$0xff] %vm2700, %v2649
        %2715 = vst.msk [vmem:[%s263 + $0x70] sm:$0xff] %vm2700, %v2650
        %2716 = vst.msk [vmem:[%s263 + $0x78] sm:$0xff] %vm2700, %v2651
        %2717 = vst.msk [vmem:[%s263 + $0x80] sm:$0xff] %vm2700, %v2652
        %2718 = vst.msk [vmem:[%s263 + $0x88] sm:$0xff] %vm2700, %v2653
        %2719 = vst.msk [vmem:[%s263 + $0x90] sm:$0xff] %vm2700, %v2654
        %2720 = vst.msk [vmem:[%s263 + $0x98] sm:$0xff] %vm2700, %v2655
        %2721 = vst.msk [vmem:[%s263 + $0xa0] sm:$0xff] %vm2700, %v2656
        %2722 = vst.msk [vmem:[%s263 + $0xa8] sm:$0xff] %vm2700, %v2657
        %2723 = vst.msk [vmem:[%s263 + $0xb0] sm:$0xff] %vm2700, %v2658
        %2724 = vst.msk [vmem:[%s263 + $0xb8] sm:$0xff] %vm2700, %v2659
        %2725 = vst.msk [vmem:[%s263 + $0xc0] sm:$0xff] %vm2700, %v2660
        %2726 = vst.msk [vmem:[%s263 + $0xc8] sm:$0xff] %vm2700, %v2661
        %2727 = vst.msk [vmem:[%s263 + $0xd0] sm:$0xff] %vm2700, %v2662
        %2728 = vst.msk [vmem:[%s263 + $0xd8] sm:$0xff] %vm2700, %v2663
        %2729 = vst.msk [vmem:[%s263 + $0xe0] sm:$0xff] %vm2700, %v2664
        %2730 = vst.msk [vmem:[%s263 + $0xe8] sm:$0xff] %vm2700, %v2665
        %2731 = vst.msk [vmem:[%s263 + $0xf0] sm:$0xff] %vm2700, %v2666
        %2732 = vst.msk [vmem:[%s263 + $0xf8] sm:$0xff] %vm2700, %v2667
        %2733 = vst.msk [vmem:[%s263 + $0x100] sm:$0xff] %vm2700, %v2668
        %2734 = vst.msk [vmem:[%s263 + $0x108] sm:$0xff] %vm2700, %v2669
        %2735 = vst.msk [vmem:[%s263 + $0x110] sm:$0xff] %vm2700, %v2670
        %2736 = vst.msk [vmem:[%s263 + $0x118] sm:$0xff] %vm2700, %v2671
        %2737 = vst.msk [vmem:[%s263 + $0x120] sm:$0xff] %vm2700, %v2672
        %2738 = vst.msk [vmem:[%s263 + $0x128] sm:$0xff] %vm2700, %v2673
        %2739 = vst.msk [vmem:[%s263 + $0x130] sm:$0xff] %vm2700, %v2674
        %2740 = vst.msk [vmem:[%s263 + $0x138] sm:$0xff] %vm2700, %v2675
        %2741 = vst.msk [vmem:[%s263 + $0x140] sm:$0xff] %vm2700, %v2676
        %2742 = vst.msk [vmem:[%s263 + $0x148] sm:$0xff] %vm2700, %v2677
        %2743 = vst.msk [vmem:[%s263 + $0x150] sm:$0xff] %vm2700, %v2678
        %2744 = vst.msk [vmem:[%s263 + $0x158] sm:$0xff] %vm2700, %v2679
        %2745 = vst.msk [vmem:[%s263 + $0x160] sm:$0xff] %vm2700, %v2680
        %2746 = vst.msk [vmem:[%s263 + $0x168] sm:$0xff] %vm2700, %v2681
        %2747 = vst.msk [vmem:[%s263 + $0x170] sm:$0xff] %vm2700, %v2682
        %2748 = vst.msk [vmem:[%s263 + $0x178] sm:$0xff] %vm2700, %v2683
        %2749 = vst.msk [vmem:[%s263 + $0x180] sm:$0xff] %vm2700, %v2684
        %2750 = vst.msk [vmem:[%s263 + $0x188] sm:$0xff] %vm2700, %v2685
        %2751 = vst.msk [vmem:[%s263 + $0x190] sm:$0xff] %vm2700, %v2686
        %2752 = vst.msk [vmem:[%s263 + $0x198] sm:$0xff] %vm2700, %v2687
        %2753 = vst.msk [vmem:[%s263 + $0x1a0] sm:$0xff] %vm2700, %v2688
        %2754 = vst.msk [vmem:[%s263 + $0x1a8] sm:$0xff] %vm2700, %v2689
        %2755 = vst.msk [vmem:[%s263 + $0x1b0] sm:$0xff] %vm2700, %v2690
        %2756 = vst.msk [vmem:[%s263 + $0x1b8] sm:$0xff] %vm2700, %v2691
        %2757 = vst.msk [vmem:[%s263 + $0x1c0] sm:$0xff] %vm2700, %v2692
        %2758 = vst.msk [vmem:[%s263 + $0x1c8] sm:$0xff] %vm2700, %v2693
        %2759 = vst.msk [vmem:[%s263 + $0x1d0] sm:$0xff] %vm2700, %v2694
        %2760 = vst.msk [vmem:[%s263 + $0x1d8] sm:$0xff] %vm2700, %v2695
        %2761 = vst.msk [vmem:[%s263 + $0x1e0] sm:$0xff] %vm2700, %v2696
        %2762 = vst.msk [vmem:[%s263 + $0x1e8] sm:$0xff] %vm2700, %v2697
        %2763 = vst.msk [vmem:[%s263 + $0x1f0] sm:$0xff] %vm2700, %v2698
        %2764 = vst.msk [vmem:[%s263 + $0x1f8] sm:$0xff] %vm2700, %v2699
        %s2765 = smul.u32 64, %s22
        %p2766 = scmp.lt.s32.totalorder %s2765, 127
        %s2767 = scalar_select %p2766, %s2765, 127
        %s2768 = smul.addr %s2767, 8
        %s2769 = scalar_lea.vmem %s5, %s2768
        // Predicated region
        $region49: #{tpu_custom_call.1} parent=39 // pred_check
          %p2770 = pneg %p150
        $region50: #{tpu_custom_call.1} parent=39 // pred_check_branch
          %2772 = sbr.rel (%p2770) target = $region52
        $region51: #{tpu_custom_call.1} parent=39 // pred_region
          %s2773 = smul.u32 64, %s22
        $region52: #{tpu_custom_call.1} parent=39 // pred_fallthru
          _
      $region40: #{tpu_custom_call.1} parent=5 // pred_fallthru
        _
      %p2774 = scmp.le.s32.totalorder 2, %s17
      // Predicated region
      $region53: #{tpu_custom_call.1} parent=5 // pred_check
        %p2775 = pneg %p2774
      $region54: #{tpu_custom_call.1} parent=5 // pred_check_branch
        %2777 = sbr.rel (%p2775) target = $region56
      $region55: #{tpu_custom_call.1} parent=5 // pred_region
        %s2778 = ssub.s32 %s17, 2
        // Predicated region
        $region57: #{tpu_custom_call.1} parent=55 // pred_check
          %p2779 = pneg %p156
        $region58: #{tpu_custom_call.1} parent=55 // pred_check_branch
          %2781 = sbr.rel (%p2779) target = $region60
        $region59: #{tpu_custom_call.1} parent=55 // pred_region
          %s2782 = smul.u32 64, %s23
          %p2783 = scmp.lt.s32.totalorder %s2782, 127
          %s2784 = scalar_select %p2783, %s2782, 127
          %s2785 = smul.addr %s2784, 8
          %s2786 = scalar_lea.vmem %s5, %s2785
        $region60: #{tpu_custom_call.1} parent=55 // pred_fallthru
          _
      $region56: #{tpu_custom_call.1} parent=5 // pred_fallthru
        _
    $region6: #{tpu_custom_call.1} parent=1 // loop_footer
      %s21 = sadd.s32 1, %s17
    $region7: #{tpu_custom_call.1} parent=1 // loop_footer_branch
      %16 = sbr.rel target = $region3
    $region8: #{tpu_custom_call.1} parent=1 // loop_exit
      _
    %2787 = vsyncpa [#allocation4], 1
    %s2788 = scalar_lea.sflag [#allocation4], 1
    %2789 = vsyncpa %s2788, 1
    %2790 = vsyncpa [#allocation6], 1

</llo_original>
